<compile_context>
chip_gen: v5e
topology: v5e:2x2
jax: 0.10.0
libtpu: 0.0.40
codegen_flags: <defaults>
</compile_context>

<pallas_src>
import functools
import math

import numpy as np

import jax
import jax.numpy as jnp
from jax.experimental import pallas as pl
from jax.experimental.pallas import tpu as pltpu


_DILS = (1, 2, 4, 6)      # down-conv dilation followed by the 3 branch dilations
_BN_EPS = 1e-5
_PREP_KEYS = ("masks", "wd", "bd", "ad", "wb", "bb", "ab",
              "w1t", "b1", "w2", "b2", "wf", "bf", "af")


def _round_up(x, m):
    return ((x + m - 1) // m) * m


# ---------------------------------------------------------------------------
# Fused kernel: one batch element per grid step, everything resident in VMEM.
# ---------------------------------------------------------------------------
def _aspp_kernel(x_ref, masks_ref, wd_ref, bd_ref, ad_ref,
                 wb_ref, bb_ref, ab_ref,
                 w1t_ref, b1_ref, w2_ref, b2_ref,
                 wf_ref, bf_ref, af_ref, o_ref,
                 *, H, W, compute_dtype):
    HW = H * W
    mask_base = {d: 9 * i for i, d in enumerate(_DILS)}

    def mm(a, b):
        # MXU matmul; compute_dtype is the bf16 knob for v6e/v7x at larger
        # channel counts, f32 accumulation either way.
        return jnp.dot(a.astype(compute_dtype), b.astype(compute_dtype),
                       preferred_element_type=jnp.float32)

    def prelu(y, a):
        return jnp.where(y >= 0.0, y, y * a)

    def taps(t, d):
        """9 dilated 3x3 taps of t (C, HW): lane-rolled + border-masked."""
        base = mask_base[d]
        out = []
        for kh in range(3):
            for kw in range(3):
                dy, dx = (kh - 1) * d, (kw - 1) * d
                s = dy * W + dx
                if s == 0:                       # center tap: no shift, no mask
                    out.append(t)
                    continue
                rolled = pltpu.roll(t, shift=(-s) % HW, axis=1)
                m = masks_ref[pl.ds(base + kh * 3 + kw, 1), :]     # (1, HW)
                out.append(rolled * m)
        return out

    x0 = x_ref[0]                                                  # (cpad, HW)

    # -- down_conv: 3x3 (d=1) as a single im2col matmul + folded-BN + PReLU --
    p0 = jnp.concatenate(taps(x0, 1), axis=0)                      # (9*cpad, HW)
    xd = prelu(mm(wd_ref[...], p0) + bd_ref[...], ad_ref[...])     # (in_pad, HW)

    # -- all 5 branches as ONE block matmul over [x | taps(x,2) | taps(x,4) |
    #    taps(x,6)]; output rows are already in torch.cat(c1..c5) order. ----
    pieces = [xd]
    for d in _DILS[1:]:
        pieces.extend(taps(xd, d))
    pbig = jnp.concatenate(pieces, axis=0)                         # (28*in_pad, HW)
    fuse = prelu(mm(wb_ref[...], pbig) + bb_ref[...], ab_ref[...])  # (5*dd, HW)

    # -- channel attention (squeeze/excite, VPU only) + residual --------------
    pooled = jnp.sum(fuse, axis=1, keepdims=True) * (1.0 / HW)     # (C5, 1)
    h = jnp.sum(w1t_ref[...] * pooled, axis=0, keepdims=True)      # (1, Cr)
    h = jnp.maximum(h + b1_ref[...], 0.0)
    g = jnp.sum(w2_ref[...] * h, axis=1, keepdims=True) + b2_ref[...]   # (C5, 1)
    fuse = fuse * (1.0 + jax.nn.sigmoid(g))        # fuse + fuse*sigmoid(gate)

    # -- fuse 1x1 conv + folded-BN + PReLU ------------------------------------
    y = mm(wf_ref[...], fuse) + bf_ref[...]
    o_ref[0] = prelu(y, af_ref[...])


# ---------------------------------------------------------------------------
# One-time parameter preparation: fold BN, build the fused branch weight and
# the border-validity masks.  (Hoisted out of the forward path.)
# ---------------------------------------------------------------------------
def prepare_aspp_params(params, H, W, eps=_BN_EPS):
    def fold(p):
        scale = p["gamma"] / jnp.sqrt(p["var"] + eps)
        w = p["w"] * scale[:, None, None, None]
        b = (p["beta"] + (p["b"] - p["mean"]) * scale)[:, None]
        return w, b, p["alpha"]

    def mat3(w):      # (Cout, Cin, 3, 3) -> (Cout, 9*Cin), tap-major (kh, kw, ci)
        co, ci = w.shape[0], w.shape[1]
        return jnp.transpose(w, (0, 2, 3, 1)).reshape(co, 9 * ci)

    dim = params["down"]["w"].shape[1]
    cpad = _round_up(dim, 8)               # pad input channels to a sublane tile

    # down conv: Cin padded to cpad, Cout padded to in_pad so every im2col
    # concat piece in the branch matmul stays 8-row aligned.
    wd, bd, ad = fold(params["down"])
    in_dim = wd.shape[0]
    in_pad = _round_up(in_dim, 8)
    wd_p = jnp.pad(wd, ((0, in_pad - in_dim), (0, cpad - dim), (0, 0), (0, 0)))
    bd_p = jnp.pad(bd, ((0, in_pad - in_dim), (0, 0)))
    prep = dict(wd=mat3(wd_p), bd=bd_p,
                ad=jnp.full((in_pad, 1), ad, jnp.float32))

    # the 5 branches share one block weight over [x | P(d=2) | P(d=4) | P(d=6)]
    col_off, off = {}, in_pad
    for d in _DILS[1:]:
        col_off[d] = off
        off += 9 * in_pad
    kbig = off

    branches = (("conv1", 1, 1), ("conv2", 3, 2), ("conv3", 3, 4),
                ("conv4", 3, 6), ("conv5", 1, 1))
    down_dim = params["conv1"]["w"].shape[0]
    wb = jnp.zeros((5 * down_dim, kbig), jnp.float32)
    bb, ab = [], []
    for i, (name, k, d) in enumerate(branches):
        w, b, a = fold(params[name])
        r = i * down_dim
        if k == 1:
            wb = wb.at[r:r + down_dim, 0:in_dim].set(w.reshape(down_dim, in_dim))
        else:
            w_p = jnp.pad(w, ((0, 0), (0, in_pad - in_dim), (0, 0), (0, 0)))
            wb = wb.at[r:r + down_dim,
                       col_off[d]:col_off[d] + 9 * in_pad].set(mat3(w_p))
        bb.append(b)
        ab.append(jnp.full((down_dim, 1), a, jnp.float32))
    prep.update(wb=wb, bb=jnp.concatenate(bb, axis=0),
                ab=jnp.concatenate(ab, axis=0))

    # fuse 1x1 conv
    wf, bf, af = fold(params["fuse"])
    prep.update(wf=wf.reshape(wf.shape[0], wf.shape[1]), bf=bf,
                af=jnp.full((wf.shape[0], 1), af, jnp.float32))

    # channel attention (VPU form: w1 transposed, b1 as a row vector)
    ca = params["catt"]
    prep.update(w1t=jnp.transpose(ca["w1"]), b1=ca["b1"][None, :],
                w2=ca["w2"], b2=ca["b2"][:, None])

    # border-validity masks for every (dilation, tap), precomputed on host
    hh = np.arange(H)[:, None]
    ww = np.arange(W)[None, :]
    rows = []
    for d in _DILS:
        for kh in range(3):
            for kw in range(3):
                dy, dx = (kh - 1) * d, (kw - 1) * d
                ok = ((hh + dy >= 0) & (hh + dy < H) &
                      (ww + dx >= 0) & (ww + dx < W))
                rows.append(ok.reshape(1, H * W))
    prep["masks"] = jnp.asarray(np.concatenate(rows, 0).astype(np.float32))
    return prep


# ---------------------------------------------------------------------------
# Forward wrapper (single fused pallas_call)
# ---------------------------------------------------------------------------
def aspp_forward(x_nchw, prep, *, compute_dtype=jnp.float32):
    """Fused ASPP forward.  x_nchw: (N, dim, H, W) -> (N, in_dim, H, W)."""
    N, cin, H, W = x_nchw.shape
    HW = H * W
    out_dim = prep["wf"].shape[0]
    cpad = prep["wd"].shape[1] // 9

    x = x_nchw.reshape(N, cin, HW).astype(jnp.float32)   # NCHW -> (N, C, HW), free
    if cpad != cin:
        x = jnp.pad(x, ((0, 0), (0, cpad - cin), (0, 0)))

    def const_spec(a):
        # constant block index -> Pallas keeps the weight tile resident across
        # grid steps (no re-DMA per image)
        return pl.BlockSpec(a.shape, lambda n: (0,) * a.ndim)

    out = pl.pallas_call(
        functools.partial(_aspp_kernel, H=H, W=W, compute_dtype=compute_dtype),
        out_shape=jax.ShapeDtypeStruct((N, out_dim, HW), jnp.float32),
        grid=(N,),
        in_specs=[pl.BlockSpec((1, cpad, HW), lambda n: (n, 0, 0))]
                 + [const_spec(prep[k]) for k in _PREP_KEYS],
        out_specs=pl.BlockSpec((1, out_dim, HW), lambda n: (n, 0, 0)),
        compiler_params=pltpu.CompilerParams(
            dimension_semantics=("parallel",)),   # v7x: batch across the 2 TCs
    )(x, *(prep[k] for k in _PREP_KEYS))
    return out.reshape(N, out_dim, H, W)


# ---------------------------------------------------------------------------
# Pure-JAX reference (eval-mode BN), used for an in-script correctness check.
# ---------------------------------------------------------------------------
def _block_ref(x, p, dilation, eps=_BN_EPS):
    kh = p["w"].shape[2]
    pad = dilation * (kh // 2)
    y = jax.lax.conv_general_dilated(
        x, p["w"], window_strides=(1, 1),
        padding=[(pad, pad), (pad, pad)],
        rhs_dilation=(dilation, dilation),
        dimension_numbers=("NCHW", "OIHW", "NCHW"),
        precision=jax.lax.Precision.HIGHEST)
    y = y + p["b"][None, :, None, None]
    inv = (p["gamma"] / jnp.sqrt(p["var"] + eps))[None, :, None, None]
    y = (y - p["mean"][None, :, None, None]) * inv + p["beta"][None, :, None, None]
    return jnp.where(y >= 0, y, p["alpha"] * y)


def aspp_reference(x, params):
    x = _block_ref(x, params["down"], 1)
    c1 = _block_ref(x, params["conv1"], 1)
    c2 = _block_ref(x, params["conv2"], 2)
    c3 = _block_ref(x, params["conv3"], 4)
    c4 = _block_ref(x, params["conv4"], 6)
    c5 = _block_ref(x, params["conv5"], 1)
    f = jnp.concatenate([c1, c2, c3, c4, c5], axis=1)
    ca = params["catt"]
    pooled = jnp.mean(f, axis=(2, 3))                                   # (N, C5)
    h = jnp.maximum(jnp.matmul(pooled, ca["w1"].T,
                               precision=jax.lax.Precision.HIGHEST)
                    + ca["b1"][None, :], 0.0)
    g = jax.nn.sigmoid(jnp.matmul(h, ca["w2"].T,
                                  precision=jax.lax.Precision.HIGHEST)
                       + ca["b2"][None, :])
    f = f + f * g[:, :, None, None]
    return _block_ref(f, params["fuse"], 1)


# ---------------------------------------------------------------------------
# Deterministic synthetic parameters
# ---------------------------------------------------------------------------
def init_conv_bn_prelu(key, cout, cin, ksize):
    ks = jax.random.split(key, 6)
    fan_in = cin * ksize * ksize
    return dict(
        w=jax.random.normal(ks[0], (cout, cin, ksize, ksize), jnp.float32)
          / math.sqrt(fan_in),
        b=0.1 * jax.random.normal(ks[1], (cout,), jnp.float32),
        gamma=1.0 + 0.1 * jax.random.normal(ks[2], (cout,), jnp.float32),
        beta=0.1 * jax.random.normal(ks[3], (cout,), jnp.float32),
        mean=0.1 * jax.random.normal(ks[4], (cout,), jnp.float32),
        var=0.9 + 0.1 * jnp.abs(jax.random.normal(ks[5], (cout,), jnp.float32)),
        alpha=jnp.float32(0.25),        # nn.PReLU() default single parameter
    )


if __name__ == "__main__":
    key = jax.random.PRNGKey(0)
    dim, in_dim = 4, 8
    down_dim = in_dim // 2
    c5ch = 5 * down_dim                 # 20
    cr = max(c5ch // 8, 1)              # squeeze_factor = 8 -> 2
    N, H, W = 2, 16, 16

    keys = jax.random.split(key, 12)
    params = {
        "down":  init_conv_bn_prelu(keys[0], in_dim, dim, 3),
        "conv1": init_conv_bn_prelu(keys[1], down_dim, in_dim, 1),
        "conv2": init_conv_bn_prelu(keys[2], down_dim, in_dim, 3),
        "conv3": init_conv_bn_prelu(keys[3], down_dim, in_dim, 3),
        "conv4": init_conv_bn_prelu(keys[4], down_dim, in_dim, 3),
        "conv5": init_conv_bn_prelu(keys[5], down_dim, in_dim, 1),
        "fuse":  init_conv_bn_prelu(keys[6], in_dim, c5ch, 1),
        "catt": dict(
            w1=jax.random.normal(keys[7], (cr, c5ch), jnp.float32)
               / math.sqrt(c5ch),
            b1=0.1 * jax.random.normal(keys[8], (cr,), jnp.float32),
            w2=jax.random.normal(keys[9], (c5ch, cr), jnp.float32)
               / math.sqrt(cr),
            b2=0.1 * jax.random.normal(keys[10], (c5ch,), jnp.float32),
        ),
    }

    x = jax.random.normal(keys[11], (N, dim, H, W), jnp.float32)   # NCHW input

    prep = prepare_aspp_params(params, H, W)          # one-time (BN folded, masks)
    fwd = jax.jit(aspp_forward)
    out = jax.block_until_ready(fwd(x, prep))

    assert out.shape == (N, in_dim, H, W), out.shape
    assert bool(jnp.all(jnp.isfinite(out)))

    ref = aspp_reference(x, params)
    err = float(jnp.max(jnp.abs(out - ref)))
    assert err < 5e-2, f"max abs err vs reference: {err}"

    print("KERNEL_OK")
</pallas_src>

<mosaic_0001>
module attributes {stable_mosaic.version = 11 : i64} {
  func.func @_aspp_kernel(%arg0: i32, %arg1: memref<1x8x256xf32, #tpu.memory_space<vmem>>, %arg2: memref<36x256xf32, #tpu.memory_space<vmem>>, %arg3: memref<8x72xf32, #tpu.memory_space<vmem>>, %arg4: memref<8x1xf32, #tpu.memory_space<vmem>>, %arg5: memref<8x1xf32, #tpu.memory_space<vmem>>, %arg6: memref<20x224xf32, #tpu.memory_space<vmem>>, %arg7: memref<20x1xf32, #tpu.memory_space<vmem>>, %arg8: memref<20x1xf32, #tpu.memory_space<vmem>>, %arg9: memref<20x2xf32, #tpu.memory_space<vmem>>, %arg10: memref<1x2xf32, #tpu.memory_space<vmem>>, %arg11: memref<20x2xf32, #tpu.memory_space<vmem>>, %arg12: memref<20x1xf32, #tpu.memory_space<vmem>>, %arg13: memref<8x20xf32, #tpu.memory_space<vmem>>, %arg14: memref<8x1xf32, #tpu.memory_space<vmem>>, %arg15: memref<8x1xf32, #tpu.memory_space<vmem>>, %arg16: memref<1x8x256xf32, #tpu.memory_space<vmem>>) attributes {dimension_semantics = [#tpu.dimension_semantics<parallel>], iteration_bounds = array<i64: 2>, scalar_prefetch = 0 : i64, scratch_operands = 0 : i64, tpu.core_type = #tpu.core_type<tc>, window_params = [{transform_indices = @transform_0, window_bounds = array<i64: 1, 8, 256>}, {pipeline_mode = #tpu.pipeline_mode<synchronous>, transform_indices = @transform_1, window_bounds = array<i64: 36, 256>}, {pipeline_mode = #tpu.pipeline_mode<synchronous>, transform_indices = @transform_2, window_bounds = array<i64: 8, 72>}, {pipeline_mode = #tpu.pipeline_mode<synchronous>, transform_indices = @transform_3, window_bounds = array<i64: 8, 1>}, {pipeline_mode = #tpu.pipeline_mode<synchronous>, transform_indices = @transform_4, window_bounds = array<i64: 8, 1>}, {pipeline_mode = #tpu.pipeline_mode<synchronous>, transform_indices = @transform_5, window_bounds = array<i64: 20, 224>}, {pipeline_mode = #tpu.pipeline_mode<synchronous>, transform_indices = @transform_6, window_bounds = array<i64: 20, 1>}, {pipeline_mode = #tpu.pipeline_mode<synchronous>, transform_indices = @transform_7, window_bounds = array<i64: 20, 1>}, {pipeline_mode = #tpu.pipeline_mode<synchronous>, transform_indices = @transform_8, window_bounds = array<i64: 20, 2>}, {pipeline_mode = #tpu.pipeline_mode<synchronous>, transform_indices = @transform_9, window_bounds = array<i64: 1, 2>}, {pipeline_mode = #tpu.pipeline_mode<synchronous>, transform_indices = @transform_10, window_bounds = array<i64: 20, 2>}, {pipeline_mode = #tpu.pipeline_mode<synchronous>, transform_indices = @transform_11, window_bounds = array<i64: 20, 1>}, {pipeline_mode = #tpu.pipeline_mode<synchronous>, transform_indices = @transform_12, window_bounds = array<i64: 8, 20>}, {pipeline_mode = #tpu.pipeline_mode<synchronous>, transform_indices = @transform_13, window_bounds = array<i64: 8, 1>}, {pipeline_mode = #tpu.pipeline_mode<synchronous>, transform_indices = @transform_14, window_bounds = array<i64: 8, 1>}, {transform_indices = @transform_15, window_bounds = array<i64: 1, 8, 256>}]} {
    %c0 = arith.constant 0 : index
    %c0_0 = arith.constant 0 : index
    %c0_1 = arith.constant 0 : index
    %0 = vector.load %arg1[%c0, %c0_0, %c0_1] : memref<1x8x256xf32, #tpu.memory_space<vmem>>, vector<1x8x256xf32>
    %1 = vector.shape_cast %0 : vector<1x8x256xf32> to vector<8x256xf32>
    %c17_i32 = arith.constant 17 : i32
    %2 = tpu.dynamic_rotate %1 by %c17_i32 dim 1 : vector<8x256xf32>, i32 -> vector<8x256xf32>
    %c0_2 = arith.constant 0 : index
    %c0_3 = arith.constant 0 : index
    %3 = vector.load %arg2[%c0_2, %c0_3] : memref<36x256xf32, #tpu.memory_space<vmem>>, vector<1x256xf32>
    %4 = vector.broadcast %3 : vector<1x256xf32> to vector<8x256xf32>
    %5 = arith.mulf %2, %4 : vector<8x256xf32>
    %c16_i32 = arith.constant 16 : i32
    %6 = tpu.dynamic_rotate %1 by %c16_i32 dim 1 : vector<8x256xf32>, i32 -> vector<8x256xf32>
    %c1 = arith.constant 1 : index
    %c0_4 = arith.constant 0 : index
    %7 = vector.load %arg2[%c1, %c0_4] : memref<36x256xf32, #tpu.memory_space<vmem>>, vector<1x256xf32>
    %8 = vector.broadcast %7 : vector<1x256xf32> to vector<8x256xf32>
    %9 = arith.mulf %6, %8 : vector<8x256xf32>
    %c15_i32 = arith.constant 15 : i32
    %10 = tpu.dynamic_rotate %1 by %c15_i32 dim 1 : vector<8x256xf32>, i32 -> vector<8x256xf32>
    %c2 = arith.constant 2 : index
    %c0_5 = arith.constant 0 : index
    %11 = vector.load %arg2[%c2, %c0_5] : memref<36x256xf32, #tpu.memory_space<vmem>>, vector<1x256xf32>
    %12 = vector.broadcast %11 : vector<1x256xf32> to vector<8x256xf32>
    %13 = arith.mulf %10, %12 : vector<8x256xf32>
    %c1_i32 = arith.constant 1 : i32
    %14 = tpu.dynamic_rotate %1 by %c1_i32 dim 1 : vector<8x256xf32>, i32 -> vector<8x256xf32>
    %c3 = arith.constant 3 : index
    %c0_6 = arith.constant 0 : index
    %15 = vector.load %arg2[%c3, %c0_6] : memref<36x256xf32, #tpu.memory_space<vmem>>, vector<1x256xf32>
    %16 = vector.broadcast %15 : vector<1x256xf32> to vector<8x256xf32>
    %17 = arith.mulf %14, %16 : vector<8x256xf32>
    %c255_i32 = arith.constant 255 : i32
    %18 = tpu.dynamic_rotate %1 by %c255_i32 dim 1 : vector<8x256xf32>, i32 -> vector<8x256xf32>
    %c5 = arith.constant 5 : index
    %c0_7 = arith.constant 0 : index
    %19 = vector.load %arg2[%c5, %c0_7] : memref<36x256xf32, #tpu.memory_space<vmem>>, vector<1x256xf32>
    %20 = vector.broadcast %19 : vector<1x256xf32> to vector<8x256xf32>
    %21 = arith.mulf %18, %20 : vector<8x256xf32>
    %c241_i32 = arith.constant 241 : i32
    %22 = tpu.dynamic_rotate %1 by %c241_i32 dim 1 : vector<8x256xf32>, i32 -> vector<8x256xf32>
    %c6 = arith.constant 6 : index
    %c0_8 = arith.constant 0 : index
    %23 = vector.load %arg2[%c6, %c0_8] : memref<36x256xf32, #tpu.memory_space<vmem>>, vector<1x256xf32>
    %24 = vector.broadcast %23 : vector<1x256xf32> to vector<8x256xf32>
    %25 = arith.mulf %22, %24 : vector<8x256xf32>
    %c240_i32 = arith.constant 240 : i32
    %26 = tpu.dynamic_rotate %1 by %c240_i32 dim 1 : vector<8x256xf32>, i32 -> vector<8x256xf32>
    %c7 = arith.constant 7 : index
    %c0_9 = arith.constant 0 : index
    %27 = vector.load %arg2[%c7, %c0_9] : memref<36x256xf32, #tpu.memory_space<vmem>>, vector<1x256xf32>
    %28 = vector.broadcast %27 : vector<1x256xf32> to vector<8x256xf32>
    %29 = arith.mulf %26, %28 : vector<8x256xf32>
    %c239_i32 = arith.constant 239 : i32
    %30 = tpu.dynamic_rotate %1 by %c239_i32 dim 1 : vector<8x256xf32>, i32 -> vector<8x256xf32>
    %c8 = arith.constant 8 : index
    %c0_10 = arith.constant 0 : index
    %31 = vector.load %arg2[%c8, %c0_10] : memref<36x256xf32, #tpu.memory_space<vmem>>, vector<1x256xf32>
    %32 = vector.broadcast %31 : vector<1x256xf32> to vector<8x256xf32>
    %33 = arith.mulf %30, %32 : vector<8x256xf32>
    %34 = tpu.concatenate %5, %9, %13, %17, %1, %21, %25, %29, %33 in 0 : vector<8x256xf32>, vector<8x256xf32>, vector<8x256xf32>, vector<8x256xf32>, vector<8x256xf32>, vector<8x256xf32>, vector<8x256xf32>, vector<8x256xf32>, vector<8x256xf32> -> vector<72x256xf32>
    %c0_11 = arith.constant 0 : index
    %c0_12 = arith.constant 0 : index
    %35 = vector.load %arg3[%c0_11, %c0_12] : memref<8x72xf32, #tpu.memory_space<vmem>>, vector<8x72xf32>
    %cst = arith.constant dense<0.000000e+00> : vector<8x256xf32>
    %36 = tpu.matmul %35, %34, %cst {dimension_numbers = #tpu.dot_dimension_numbers<[1], [0], [0], [1], [0, 0, 1, 1], [], []>} : vector<8x72xf32>, vector<72x256xf32>, vector<8x256xf32> -> vector<8x256xf32>
    %c0_13 = arith.constant 0 : index
    %c0_14 = arith.constant 0 : index
    %37 = vector.load %arg4[%c0_13, %c0_14] : memref<8x1xf32, #tpu.memory_space<vmem>>, vector<8x1xf32>
    %38 = vector.broadcast %37 : vector<8x1xf32> to vector<8x256xf32>
    %39 = arith.addf %36, %38 : vector<8x256xf32>
    %c0_15 = arith.constant 0 : index
    %c0_16 = arith.constant 0 : index
    %40 = vector.load %arg5[%c0_15, %c0_16] : memref<8x1xf32, #tpu.memory_space<vmem>>, vector<8x1xf32>
    %cst_17 = arith.constant 0.000000e+00 : f32
    %41 = vector.broadcast %cst_17 : f32 to vector<8x256xf32>
    %42 = arith.cmpf oge, %39, %41 : vector<8x256xf32>
    %43 = vector.broadcast %40 : vector<8x1xf32> to vector<8x256xf32>
    %44 = arith.mulf %39, %43 : vector<8x256xf32>
    %45 = arith.select %42, %39, %44 : vector<8x256xi1>, vector<8x256xf32>
    %c34_i32 = arith.constant 34 : i32
    %46 = tpu.dynamic_rotate %45 by %c34_i32 dim 1 : vector<8x256xf32>, i32 -> vector<8x256xf32>
    %c9 = arith.constant 9 : index
    %c0_18 = arith.constant 0 : index
    %47 = vector.load %arg2[%c9, %c0_18] : memref<36x256xf32, #tpu.memory_space<vmem>>, vector<1x256xf32>
    %48 = vector.broadcast %47 : vector<1x256xf32> to vector<8x256xf32>
    %49 = arith.mulf %46, %48 : vector<8x256xf32>
    %c32_i32 = arith.constant 32 : i32
    %50 = tpu.dynamic_rotate %45 by %c32_i32 dim 1 : vector<8x256xf32>, i32 -> vector<8x256xf32>
    %c10 = arith.constant 10 : index
    %c0_19 = arith.constant 0 : index
    %51 = vector.load %arg2[%c10, %c0_19] : memref<36x256xf32, #tpu.memory_space<vmem>>, vector<1x256xf32>
    %52 = vector.broadcast %51 : vector<1x256xf32> to vector<8x256xf32>
    %53 = arith.mulf %50, %52 : vector<8x256xf32>
    %c30_i32 = arith.constant 30 : i32
    %54 = tpu.dynamic_rotate %45 by %c30_i32 dim 1 : vector<8x256xf32>, i32 -> vector<8x256xf32>
    %c11 = arith.constant 11 : index
    %c0_20 = arith.constant 0 : index
    %55 = vector.load %arg2[%c11, %c0_20] : memref<36x256xf32, #tpu.memory_space<vmem>>, vector<1x256xf32>
    %56 = vector.broadcast %55 : vector<1x256xf32> to vector<8x256xf32>
    %57 = arith.mulf %54, %56 : vector<8x256xf32>
    %c2_i32 = arith.constant 2 : i32
    %58 = tpu.dynamic_rotate %45 by %c2_i32 dim 1 : vector<8x256xf32>, i32 -> vector<8x256xf32>
    %c12 = arith.constant 12 : index
    %c0_21 = arith.constant 0 : index
    %59 = vector.load %arg2[%c12, %c0_21] : memref<36x256xf32, #tpu.memory_space<vmem>>, vector<1x256xf32>
    %60 = vector.broadcast %59 : vector<1x256xf32> to vector<8x256xf32>
    %61 = arith.mulf %58, %60 : vector<8x256xf32>
    %c254_i32 = arith.constant 254 : i32
    %62 = tpu.dynamic_rotate %45 by %c254_i32 dim 1 : vector<8x256xf32>, i32 -> vector<8x256xf32>
    %c14 = arith.constant 14 : index
    %c0_22 = arith.constant 0 : index
    %63 = vector.load %arg2[%c14, %c0_22] : memref<36x256xf32, #tpu.memory_space<vmem>>, vector<1x256xf32>
    %64 = vector.broadcast %63 : vector<1x256xf32> to vector<8x256xf32>
    %65 = arith.mulf %62, %64 : vector<8x256xf32>
    %c226_i32 = arith.constant 226 : i32
    %66 = tpu.dynamic_rotate %45 by %c226_i32 dim 1 : vector<8x256xf32>, i32 -> vector<8x256xf32>
    %c15 = arith.constant 15 : index
    %c0_23 = arith.constant 0 : index
    %67 = vector.load %arg2[%c15, %c0_23] : memref<36x256xf32, #tpu.memory_space<vmem>>, vector<1x256xf32>
    %68 = vector.broadcast %67 : vector<1x256xf32> to vector<8x256xf32>
    %69 = arith.mulf %66, %68 : vector<8x256xf32>
    %c224_i32 = arith.constant 224 : i32
    %70 = tpu.dynamic_rotate %45 by %c224_i32 dim 1 : vector<8x256xf32>, i32 -> vector<8x256xf32>
    %c16 = arith.constant 16 : index
    %c0_24 = arith.constant 0 : index
    %71 = vector.load %arg2[%c16, %c0_24] : memref<36x256xf32, #tpu.memory_space<vmem>>, vector<1x256xf32>
    %72 = vector.broadcast %71 : vector<1x256xf32> to vector<8x256xf32>
    %73 = arith.mulf %70, %72 : vector<8x256xf32>
    %c222_i32 = arith.constant 222 : i32
    %74 = tpu.dynamic_rotate %45 by %c222_i32 dim 1 : vector<8x256xf32>, i32 -> vector<8x256xf32>
    %c17 = arith.constant 17 : index
    %c0_25 = arith.constant 0 : index
    %75 = vector.load %arg2[%c17, %c0_25] : memref<36x256xf32, #tpu.memory_space<vmem>>, vector<1x256xf32>
    %76 = vector.broadcast %75 : vector<1x256xf32> to vector<8x256xf32>
    %77 = arith.mulf %74, %76 : vector<8x256xf32>
    %c68_i32 = arith.constant 68 : i32
    %78 = tpu.dynamic_rotate %45 by %c68_i32 dim 1 : vector<8x256xf32>, i32 -> vector<8x256xf32>
    %c18 = arith.constant 18 : index
    %c0_26 = arith.constant 0 : index
    %79 = vector.load %arg2[%c18, %c0_26] : memref<36x256xf32, #tpu.memory_space<vmem>>, vector<1x256xf32>
    %80 = vector.broadcast %79 : vector<1x256xf32> to vector<8x256xf32>
    %81 = arith.mulf %78, %80 : vector<8x256xf32>
    %c64_i32 = arith.constant 64 : i32
    %82 = tpu.dynamic_rotate %45 by %c64_i32 dim 1 : vector<8x256xf32>, i32 -> vector<8x256xf32>
    %c19 = arith.constant 19 : index
    %c0_27 = arith.constant 0 : index
    %83 = vector.load %arg2[%c19, %c0_27] : memref<36x256xf32, #tpu.memory_space<vmem>>, vector<1x256xf32>
    %84 = vector.broadcast %83 : vector<1x256xf32> to vector<8x256xf32>
    %85 = arith.mulf %82, %84 : vector<8x256xf32>
    %c60_i32 = arith.constant 60 : i32
    %86 = tpu.dynamic_rotate %45 by %c60_i32 dim 1 : vector<8x256xf32>, i32 -> vector<8x256xf32>
    %c20 = arith.constant 20 : index
    %c0_28 = arith.constant 0 : index
    %87 = vector.load %arg2[%c20, %c0_28] : memref<36x256xf32, #tpu.memory_space<vmem>>, vector<1x256xf32>
    %88 = vector.broadcast %87 : vector<1x256xf32> to vector<8x256xf32>
    %89 = arith.mulf %86, %88 : vector<8x256xf32>
    %c4_i32 = arith.constant 4 : i32
    %90 = tpu.dynamic_rotate %45 by %c4_i32 dim 1 : vector<8x256xf32>, i32 -> vector<8x256xf32>
    %c21 = arith.constant 21 : index
    %c0_29 = arith.constant 0 : index
    %91 = vector.load %arg2[%c21, %c0_29] : memref<36x256xf32, #tpu.memory_space<vmem>>, vector<1x256xf32>
    %92 = vector.broadcast %91 : vector<1x256xf32> to vector<8x256xf32>
    %93 = arith.mulf %90, %92 : vector<8x256xf32>
    %c252_i32 = arith.constant 252 : i32
    %94 = tpu.dynamic_rotate %45 by %c252_i32 dim 1 : vector<8x256xf32>, i32 -> vector<8x256xf32>
    %c23 = arith.constant 23 : index
    %c0_30 = arith.constant 0 : index
    %95 = vector.load %arg2[%c23, %c0_30] : memref<36x256xf32, #tpu.memory_space<vmem>>, vector<1x256xf32>
    %96 = vector.broadcast %95 : vector<1x256xf32> to vector<8x256xf32>
    %97 = arith.mulf %94, %96 : vector<8x256xf32>
    %c196_i32 = arith.constant 196 : i32
    %98 = tpu.dynamic_rotate %45 by %c196_i32 dim 1 : vector<8x256xf32>, i32 -> vector<8x256xf32>
    %c24 = arith.constant 24 : index
    %c0_31 = arith.constant 0 : index
    %99 = vector.load %arg2[%c24, %c0_31] : memref<36x256xf32, #tpu.memory_space<vmem>>, vector<1x256xf32>
    %100 = vector.broadcast %99 : vector<1x256xf32> to vector<8x256xf32>
    %101 = arith.mulf %98, %100 : vector<8x256xf32>
    %c192_i32 = arith.constant 192 : i32
    %102 = tpu.dynamic_rotate %45 by %c192_i32 dim 1 : vector<8x256xf32>, i32 -> vector<8x256xf32>
    %c25 = arith.constant 25 : index
    %c0_32 = arith.constant 0 : index
    %103 = vector.load %arg2[%c25, %c0_32] : memref<36x256xf32, #tpu.memory_space<vmem>>, vector<1x256xf32>
    %104 = vector.broadcast %103 : vector<1x256xf32> to vector<8x256xf32>
    %105 = arith.mulf %102, %104 : vector<8x256xf32>
    %c188_i32 = arith.constant 188 : i32
    %106 = tpu.dynamic_rotate %45 by %c188_i32 dim 1 : vector<8x256xf32>, i32 -> vector<8x256xf32>
    %c26 = arith.constant 26 : index
    %c0_33 = arith.constant 0 : index
    %107 = vector.load %arg2[%c26, %c0_33] : memref<36x256xf32, #tpu.memory_space<vmem>>, vector<1x256xf32>
    %108 = vector.broadcast %107 : vector<1x256xf32> to vector<8x256xf32>
    %109 = arith.mulf %106, %108 : vector<8x256xf32>
    %c102_i32 = arith.constant 102 : i32
    %110 = tpu.dynamic_rotate %45 by %c102_i32 dim 1 : vector<8x256xf32>, i32 -> vector<8x256xf32>
    %c27 = arith.constant 27 : index
    %c0_34 = arith.constant 0 : index
    %111 = vector.load %arg2[%c27, %c0_34] : memref<36x256xf32, #tpu.memory_space<vmem>>, vector<1x256xf32>
    %112 = vector.broadcast %111 : vector<1x256xf32> to vector<8x256xf32>
    %113 = arith.mulf %110, %112 : vector<8x256xf32>
    %c96_i32 = arith.constant 96 : i32
    %114 = tpu.dynamic_rotate %45 by %c96_i32 dim 1 : vector<8x256xf32>, i32 -> vector<8x256xf32>
    %c28 = arith.constant 28 : index
    %c0_35 = arith.constant 0 : index
    %115 = vector.load %arg2[%c28, %c0_35] : memref<36x256xf32, #tpu.memory_space<vmem>>, vector<1x256xf32>
    %116 = vector.broadcast %115 : vector<1x256xf32> to vector<8x256xf32>
    %117 = arith.mulf %114, %116 : vector<8x256xf32>
    %c90_i32 = arith.constant 90 : i32
    %118 = tpu.dynamic_rotate %45 by %c90_i32 dim 1 : vector<8x256xf32>, i32 -> vector<8x256xf32>
    %c29 = arith.constant 29 : index
    %c0_36 = arith.constant 0 : index
    %119 = vector.load %arg2[%c29, %c0_36] : memref<36x256xf32, #tpu.memory_space<vmem>>, vector<1x256xf32>
    %120 = vector.broadcast %119 : vector<1x256xf32> to vector<8x256xf32>
    %121 = arith.mulf %118, %120 : vector<8x256xf32>
    %c6_i32 = arith.constant 6 : i32
    %122 = tpu.dynamic_rotate %45 by %c6_i32 dim 1 : vector<8x256xf32>, i32 -> vector<8x256xf32>
    %c30 = arith.constant 30 : index
    %c0_37 = arith.constant 0 : index
    %123 = vector.load %arg2[%c30, %c0_37] : memref<36x256xf32, #tpu.memory_space<vmem>>, vector<1x256xf32>
    %124 = vector.broadcast %123 : vector<1x256xf32> to vector<8x256xf32>
    %125 = arith.mulf %122, %124 : vector<8x256xf32>
    %c250_i32 = arith.constant 250 : i32
    %126 = tpu.dynamic_rotate %45 by %c250_i32 dim 1 : vector<8x256xf32>, i32 -> vector<8x256xf32>
    %c32 = arith.constant 32 : index
    %c0_38 = arith.constant 0 : index
    %127 = vector.load %arg2[%c32, %c0_38] : memref<36x256xf32, #tpu.memory_space<vmem>>, vector<1x256xf32>
    %128 = vector.broadcast %127 : vector<1x256xf32> to vector<8x256xf32>
    %129 = arith.mulf %126, %128 : vector<8x256xf32>
    %c166_i32 = arith.constant 166 : i32
    %130 = tpu.dynamic_rotate %45 by %c166_i32 dim 1 : vector<8x256xf32>, i32 -> vector<8x256xf32>
    %c33 = arith.constant 33 : index
    %c0_39 = arith.constant 0 : index
    %131 = vector.load %arg2[%c33, %c0_39] : memref<36x256xf32, #tpu.memory_space<vmem>>, vector<1x256xf32>
    %132 = vector.broadcast %131 : vector<1x256xf32> to vector<8x256xf32>
    %133 = arith.mulf %130, %132 : vector<8x256xf32>
    %c160_i32 = arith.constant 160 : i32
    %134 = tpu.dynamic_rotate %45 by %c160_i32 dim 1 : vector<8x256xf32>, i32 -> vector<8x256xf32>
    %c34 = arith.constant 34 : index
    %c0_40 = arith.constant 0 : index
    %135 = vector.load %arg2[%c34, %c0_40] : memref<36x256xf32, #tpu.memory_space<vmem>>, vector<1x256xf32>
    %136 = vector.broadcast %135 : vector<1x256xf32> to vector<8x256xf32>
    %137 = arith.mulf %134, %136 : vector<8x256xf32>
    %c154_i32 = arith.constant 154 : i32
    %138 = tpu.dynamic_rotate %45 by %c154_i32 dim 1 : vector<8x256xf32>, i32 -> vector<8x256xf32>
    %c35 = arith.constant 35 : index
    %c0_41 = arith.constant 0 : index
    %139 = vector.load %arg2[%c35, %c0_41] : memref<36x256xf32, #tpu.memory_space<vmem>>, vector<1x256xf32>
    %140 = vector.broadcast %139 : vector<1x256xf32> to vector<8x256xf32>
    %141 = arith.mulf %138, %140 : vector<8x256xf32>
    %142 = tpu.concatenate %45, %49, %53, %57, %61, %45, %65, %69, %73, %77, %81, %85, %89, %93, %45, %97 in 0 : vector<8x256xf32>, vector<8x256xf32>, vector<8x256xf32>, vector<8x256xf32>, vector<8x256xf32>, vector<8x256xf32>, vector<8x256xf32>, vector<8x256xf32>, vector<8x256xf32>, vector<8x256xf32>, vector<8x256xf32>, vector<8x256xf32>, vector<8x256xf32>, vector<8x256xf32>, vector<8x256xf32>, vector<8x256xf32> -> vector<128x256xf32>
    %143 = tpu.concatenate %101, %105, %109, %113, %117, %121, %125, %45, %129, %133, %137, %141 in 0 : vector<8x256xf32>, vector<8x256xf32>, vector<8x256xf32>, vector<8x256xf32>, vector<8x256xf32>, vector<8x256xf32>, vector<8x256xf32>, vector<8x256xf32>, vector<8x256xf32>, vector<8x256xf32>, vector<8x256xf32>, vector<8x256xf32> -> vector<96x256xf32>
    %144 = tpu.concatenate %142, %143 in 0 : vector<128x256xf32>, vector<96x256xf32> -> vector<224x256xf32>
    %c0_42 = arith.constant 0 : index
    %c0_43 = arith.constant 0 : index
    %145 = vector.load %arg6[%c0_42, %c0_43] : memref<20x224xf32, #tpu.memory_space<vmem>>, vector<20x224xf32>
    %cst_44 = arith.constant dense<0.000000e+00> : vector<20x256xf32>
    %146 = tpu.matmul %145, %144, %cst_44 {dimension_numbers = #tpu.dot_dimension_numbers<[1], [0], [0], [1], [0, 0, 1, 1], [], []>} : vector<20x224xf32>, vector<224x256xf32>, vector<20x256xf32> -> vector<20x256xf32>
    %c0_45 = arith.constant 0 : index
    %c0_46 = arith.constant 0 : index
    %147 = vector.load %arg7[%c0_45, %c0_46] : memref<20x1xf32, #tpu.memory_space<vmem>>, vector<20x1xf32>
    %148 = vector.broadcast %147 : vector<20x1xf32> to vector<20x256xf32>
    %149 = arith.addf %146, %148 : vector<20x256xf32>
    %c0_47 = arith.constant 0 : index
    %c0_48 = arith.constant 0 : index
    %150 = vector.load %arg8[%c0_47, %c0_48] : memref<20x1xf32, #tpu.memory_space<vmem>>, vector<20x1xf32>
    %cst_49 = arith.constant 0.000000e+00 : f32
    %151 = vector.broadcast %cst_49 : f32 to vector<20x256xf32>
    %152 = arith.cmpf oge, %149, %151 : vector<20x256xf32>
    %153 = vector.broadcast %150 : vector<20x1xf32> to vector<20x256xf32>
    %154 = arith.mulf %149, %153 : vector<20x256xf32>
    %155 = arith.select %152, %149, %154 : vector<20x256xi1>, vector<20x256xf32>
    %cst_50 = arith.constant dense<0.000000e+00> : vector<20xf32>
    %156 = vector.multi_reduction <add>, %155, %cst_50 [1] : vector<20x256xf32> to vector<20xf32>
    %157 = vector.shape_cast %156 : vector<20xf32> to vector<20x1xf32>
    %cst_51 = arith.constant 3.906250e-03 : f32
    %158 = vector.broadcast %cst_51 : f32 to vector<20x1xf32>
    %159 = arith.mulf %157, %158 : vector<20x1xf32>
    %c0_52 = arith.constant 0 : index
    %c0_53 = arith.constant 0 : index
    %160 = vector.load %arg9[%c0_52, %c0_53] : memref<20x2xf32, #tpu.memory_space<vmem>>, vector<20x2xf32>
    %161 = vector.broadcast %159 : vector<20x1xf32> to vector<20x2xf32>
    %162 = arith.mulf %160, %161 : vector<20x2xf32>
    %cst_54 = arith.constant dense<0.000000e+00> : vector<2xf32>
    %163 = vector.multi_reduction <add>, %162, %cst_54 [0] : vector<20x2xf32> to vector<2xf32>
    %164 = vector.shape_cast %163 : vector<2xf32> to vector<1x2xf32>
    %c0_55 = arith.constant 0 : index
    %c0_56 = arith.constant 0 : index
    %165 = vector.load %arg10[%c0_55, %c0_56] : memref<1x2xf32, #tpu.memory_space<vmem>>, vector<1x2xf32>
    %166 = arith.addf %164, %165 : vector<1x2xf32>
    %cst_57 = arith.constant 0.000000e+00 : f32
    %167 = vector.broadcast %cst_57 : f32 to vector<1x2xf32>
    %168 = arith.maximumf %166, %167 : vector<1x2xf32>
    %c0_58 = arith.constant 0 : index
    %c0_59 = arith.constant 0 : index
    %169 = vector.load %arg11[%c0_58, %c0_59] : memref<20x2xf32, #tpu.memory_space<vmem>>, vector<20x2xf32>
    %170 = vector.broadcast %168 : vector<1x2xf32> to vector<20x2xf32>
    %171 = arith.mulf %169, %170 : vector<20x2xf32>
    %cst_60 = arith.constant dense<0.000000e+00> : vector<20xf32>
    %172 = vector.multi_reduction <add>, %171, %cst_60 [1] : vector<20x2xf32> to vector<20xf32>
    %173 = vector.shape_cast %172 : vector<20xf32> to vector<20x1xf32>
    %c0_61 = arith.constant 0 : index
    %c0_62 = arith.constant 0 : index
    %174 = vector.load %arg12[%c0_61, %c0_62] : memref<20x1xf32, #tpu.memory_space<vmem>>, vector<20x1xf32>
    %175 = arith.addf %173, %174 : vector<20x1xf32>
    %176 = arith.negf %175 : vector<20x1xf32>
    %177 = math.exp %176 : vector<20x1xf32>
    %cst_63 = arith.constant 1.000000e+00 : f32
    %178 = vector.broadcast %cst_63 : f32 to vector<20x1xf32>
    %179 = arith.addf %178, %177 : vector<20x1xf32>
    %180 = arith.divf %178, %179 : vector<20x1xf32>
    %cst_64 = arith.constant 1.000000e+00 : f32
    %181 = vector.broadcast %cst_64 : f32 to vector<20x1xf32>
    %182 = arith.addf %181, %180 : vector<20x1xf32>
    %183 = vector.broadcast %182 : vector<20x1xf32> to vector<20x256xf32>
    %184 = arith.mulf %155, %183 : vector<20x256xf32>
    %c0_65 = arith.constant 0 : index
    %c0_66 = arith.constant 0 : index
    %185 = vector.load %arg13[%c0_65, %c0_66] : memref<8x20xf32, #tpu.memory_space<vmem>>, vector<8x20xf32>
    %cst_67 = arith.constant dense<0.000000e+00> : vector<8x256xf32>
    %186 = tpu.matmul %185, %184, %cst_67 {dimension_numbers = #tpu.dot_dimension_numbers<[1], [0], [0], [1], [0, 0, 1, 1], [], []>} : vector<8x20xf32>, vector<20x256xf32>, vector<8x256xf32> -> vector<8x256xf32>
    %c0_68 = arith.constant 0 : index
    %c0_69 = arith.constant 0 : index
    %187 = vector.load %arg14[%c0_68, %c0_69] : memref<8x1xf32, #tpu.memory_space<vmem>>, vector<8x1xf32>
    %188 = vector.broadcast %187 : vector<8x1xf32> to vector<8x256xf32>
    %189 = arith.addf %186, %188 : vector<8x256xf32>
    %c0_70 = arith.constant 0 : index
    %c0_71 = arith.constant 0 : index
    %190 = vector.load %arg15[%c0_70, %c0_71] : memref<8x1xf32, #tpu.memory_space<vmem>>, vector<8x1xf32>
    %cst_72 = arith.constant 0.000000e+00 : f32
    %191 = vector.broadcast %cst_72 : f32 to vector<8x256xf32>
    %192 = arith.cmpf oge, %189, %191 : vector<8x256xf32>
    %193 = vector.broadcast %190 : vector<8x1xf32> to vector<8x256xf32>
    %194 = arith.mulf %189, %193 : vector<8x256xf32>
    %195 = arith.select %192, %189, %194 : vector<8x256xi1>, vector<8x256xf32>
    %c0_73 = arith.constant 0 : index
    %c0_74 = arith.constant 0 : index
    %c0_75 = arith.constant 0 : index
    %196 = vector.load %arg16[%c0_73, %c0_74, %c0_75] : memref<1x8x256xf32, #tpu.memory_space<vmem>>, vector<1x8x256xf32>
    %197 = vector.shape_cast %196 : vector<1x8x256xf32> to vector<8x256xf32>
    %198 = vector.shape_cast %195 : vector<8x256xf32> to vector<1x8x256xf32>
    tpu.vector_store %arg16[%c0_73, %c0_74, %c0_75], %198 {strides = array<i32>} : memref<1x8x256xf32, #tpu.memory_space<vmem>>, vector<1x8x256xf32>,
    return
  }
  func.func @transform_0(%arg0: i32) -> (i32, i32, i32) {
    %c0_i32 = arith.constant 0 : i32
    %c0_i32_0 = arith.constant 0 : i32
    %c0_i32_1 = arith.constant 0 : i32
    return %arg0, %c0_i32, %c0_i32_0 : i32, i32, i32
  }
  func.func @transform_1(%arg0: i32) -> (i32, i32) {
    %c0_i32 = arith.constant 0 : i32
    %c0_i32_0 = arith.constant 0 : i32
    %c0_i32_1 = arith.constant 0 : i32
    return %c0_i32, %c0_i32_0 : i32, i32
  }
  func.func @transform_2(%arg0: i32) -> (i32, i32) {
    %c0_i32 = arith.constant 0 : i32
    %c0_i32_0 = arith.constant 0 : i32
    %c0_i32_1 = arith.constant 0 : i32
    return %c0_i32, %c0_i32_0 : i32, i32
  }
  func.func @transform_3(%arg0: i32) -> (i32, i32) {
    %c0_i32 = arith.constant 0 : i32
    %c0_i32_0 = arith.constant 0 : i32
    %c0_i32_1 = arith.constant 0 : i32
    return %c0_i32, %c0_i32_0 : i32, i32
  }
  func.func @transform_4(%arg0: i32) -> (i32, i32) {
    %c0_i32 = arith.constant 0 : i32
    %c0_i32_0 = arith.constant 0 : i32
    %c0_i32_1 = arith.constant 0 : i32
    return %c0_i32, %c0_i32_0 : i32, i32
  }
  func.func @transform_5(%arg0: i32) -> (i32, i32) {
    %c0_i32 = arith.constant 0 : i32
    %c0_i32_0 = arith.constant 0 : i32
    %c0_i32_1 = arith.constant 0 : i32
    return %c0_i32, %c0_i32_0 : i32, i32
  }
  func.func @transform_6(%arg0: i32) -> (i32, i32) {
    %c0_i32 = arith.constant 0 : i32
    %c0_i32_0 = arith.constant 0 : i32
    %c0_i32_1 = arith.constant 0 : i32
    return %c0_i32, %c0_i32_0 : i32, i32
  }
  func.func @transform_7(%arg0: i32) -> (i32, i32) {
    %c0_i32 = arith.constant 0 : i32
    %c0_i32_0 = arith.constant 0 : i32
    %c0_i32_1 = arith.constant 0 : i32
    return %c0_i32, %c0_i32_0 : i32, i32
  }
  func.func @transform_8(%arg0: i32) -> (i32, i32) {
    %c0_i32 = arith.constant 0 : i32
    %c0_i32_0 = arith.constant 0 : i32
    %c0_i32_1 = arith.constant 0 : i32
    return %c0_i32, %c0_i32_0 : i32, i32
  }
  func.func @transform_9(%arg0: i32) -> (i32, i32) {
    %c0_i32 = arith.constant 0 : i32
    %c0_i32_0 = arith.constant 0 : i32
    %c0_i32_1 = arith.constant 0 : i32
    return %c0_i32, %c0_i32_0 : i32, i32
  }
  func.func @transform_10(%arg0: i32) -> (i32, i32) {
    %c0_i32 = arith.constant 0 : i32
    %c0_i32_0 = arith.constant 0 : i32
    %c0_i32_1 = arith.constant 0 : i32
    return %c0_i32, %c0_i32_0 : i32, i32
  }
  func.func @transform_11(%arg0: i32) -> (i32, i32) {
    %c0_i32 = arith.constant 0 : i32
    %c0_i32_0 = arith.constant 0 : i32
    %c0_i32_1 = arith.constant 0 : i32
    return %c0_i32, %c0_i32_0 : i32, i32
  }
  func.func @transform_12(%arg0: i32) -> (i32, i32) {
    %c0_i32 = arith.constant 0 : i32
    %c0_i32_0 = arith.constant 0 : i32
    %c0_i32_1 = arith.constant 0 : i32
    return %c0_i32, %c0_i32_0 : i32, i32
  }
  func.func @transform_13(%arg0: i32) -> (i32, i32) {
    %c0_i32 = arith.constant 0 : i32
    %c0_i32_0 = arith.constant 0 : i32
    %c0_i32_1 = arith.constant 0 : i32
    return %c0_i32, %c0_i32_0 : i32, i32
  }
  func.func @transform_14(%arg0: i32) -> (i32, i32) {
    %c0_i32 = arith.constant 0 : i32
    %c0_i32_0 = arith.constant 0 : i32
    %c0_i32_1 = arith.constant 0 : i32
    return %c0_i32, %c0_i32_0 : i32, i32
  }
  func.func @transform_15(%arg0: i32) -> (i32, i32, i32) {
    %c0_i32 = arith.constant 0 : i32
    %c0_i32_0 = arith.constant 0 : i32
    %c0_i32_1 = arith.constant 0 : i32
    return %arg0, %c0_i32, %c0_i32_0 : i32, i32, i32
  }
}

</mosaic_0001>

<llo_original>
// kernel: aspp_forward.1
$region0: #{aspp_forward.1}
  #allocation0 [shape = 'u32[]', space=smem, size = 0x4, offset = 0x4, fixed_abs, tag = 'smem constant byte address 0x4 - core index']
  #allocation1 [shape = 'u32[72,128]{1,0:T(1,128)}', space=vmem, size = 0x9000, scoped, tag = 'internal scratch']
  %s0 = inlined_call_operand.vmem [shape: f32[2,8,256], index: 0, kind: input, shape index: {}]
  %s1 = inlined_call_operand.vmem [shape: f32[36,256], index: 1, kind: input, shape index: {}]
  %s2 = inlined_call_operand.vmem [shape: f32[8,72], index: 2, kind: input, shape index: {}]
  %s3 = inlined_call_operand.vmem [shape: f32[8,1], index: 3, kind: input, shape index: {}]
  %s4 = inlined_call_operand.vmem [shape: f32[8,1], index: 4, kind: input, shape index: {}]
  %s5 = inlined_call_operand.vmem [shape: f32[20,224], index: 5, kind: input, shape index: {}]
  %s6 = inlined_call_operand.vmem [shape: f32[20,1], index: 6, kind: input, shape index: {}]
  %s7 = inlined_call_operand.vmem [shape: f32[20,1], index: 7, kind: input, shape index: {}]
  %s8 = inlined_call_operand.vmem [shape: f32[20,2], index: 8, kind: input, shape index: {}]
  %s9 = inlined_call_operand.vmem [shape: f32[1,2], index: 9, kind: input, shape index: {}]
  %s10 = inlined_call_operand.vmem [shape: f32[20,2], index: 10, kind: input, shape index: {}]
  %s11 = inlined_call_operand.vmem [shape: f32[20,1], index: 11, kind: input, shape index: {}]
  %s12 = inlined_call_operand.vmem [shape: f32[8,20], index: 12, kind: input, shape index: {}]
  %s13 = inlined_call_operand.vmem [shape: f32[8,1], index: 13, kind: input, shape index: {}]
  %s14 = inlined_call_operand.vmem [shape: f32[8,1], index: 14, kind: input, shape index: {}]
  %s15 = inlined_call_operand.vmem [shape: f32[2,8,256], index: 15, kind: output, shape index: {}]
  %s16 = sld [smem:[#allocation0]]
  $region93: #{aspp_forward.1} parent=0
    _
  %s18 = ssub.s32 1, %s16
  %s19 = scalar_select 0, %s18, %s16
  loop: start=0, step=1, limit=4
  $region2: #{aspp_forward.1} parent=0 // loop_pre_header
    _
  $region3: #{aspp_forward.1} parent=0 // loop_header
    %s21 = sphi 0, %s25
    %p22 = scmp.ge.s32.totalorder %s21, 4
    %s31 = sphi 0, %s33
    %s34 = sphi 0, %s31
    %s35 = sphi 0, %s34
    %s51 = sphi 0, %s35
    %s55 = sphi 0, %s55
    %s57 = sphi 0, %s55
    %s58 = sphi 0, %s57
    %s72 = sphi 0, %s58
    %s76 = sphi 0, %s76
    %s78 = sphi 0, %s76
    %s79 = sphi 0, %s78
    %s93 = sphi 0, %s79
    %s97 = sphi 0, %s97
    %s99 = sphi 0, %s97
    %s100 = sphi 0, %s99
    %s114 = sphi 0, %s100
    %s118 = sphi 0, %s118
    %s120 = sphi 0, %s118
    %s121 = sphi 0, %s120
    %s135 = sphi 0, %s121
    %s139 = sphi 0, %s139
    %s141 = sphi 0, %s139
    %s142 = sphi 0, %s141
    %s156 = sphi 0, %s142
    %s160 = sphi 0, %s160
    %s162 = sphi 0, %s160
    %s163 = sphi 0, %s162
    %s177 = sphi 0, %s163
    %s181 = sphi 0, %s181
    %s183 = sphi 0, %s181
    %s184 = sphi 0, %s183
    %s198 = sphi 0, %s184
    %s202 = sphi 0, %s202
    %s204 = sphi 0, %s202
    %s205 = sphi 0, %s204
    %s219 = sphi 0, %s205
    %s223 = sphi 0, %s223
    %s225 = sphi 0, %s223
    %s226 = sphi 0, %s225
    %s240 = sphi 0, %s226
    %s244 = sphi 0, %s244
    %s246 = sphi 0, %s244
    %s247 = sphi 0, %s246
    %s261 = sphi 0, %s247
    %s265 = sphi 0, %s265
    %s267 = sphi 0, %s265
    %s268 = sphi 0, %s267
    %s282 = sphi 0, %s268
    %s286 = sphi 0, %s286
    %s288 = sphi 0, %s286
    %s289 = sphi 0, %s288
    %s303 = sphi 0, %s289
    %s307 = sphi 0, %s307
    %s309 = sphi 0, %s307
    %s310 = sphi 0, %s309
    %s324 = sphi 0, %s310
    %s328 = sphi 0, %s328
    %s330 = sphi 0, %s328
    %s331 = sphi 0, %s330
    %s345 = sphi 0, %s331
    %s351 = sphi 0, %s353
    %s354 = sphi 0, %s351
    %s355 = sphi 0, %s354
    %s371 = sphi 0, %s355
  $region4: #{aspp_forward.1} parent=0 // loop_header_branch
    %24 = sbr.rel (%p22) target = $region8
  $region5: #{aspp_forward.1} parent=0 // loop_body
    %s26 = ssub.s32 %s21, 1
    %s27 = ssub.s32 %s21, 2
    %s28 = sadd.s32 %s21, 1
    %s29 = ssub.s32 %s21, %s28
    %p30 = scmp.eq.s32.totalorder %s29, 0
    %s32 = sadd.s32 %s31, 1
    %s33 = scalar_select %p30, %s31, %s32
    %p36 = pneg %p30
    %p37 = scmp.eq.s32.totalorder %s21, 1
    %p38 = por %p36, %p37
    %p39 = scmp.ne.s32.totalorder %s31, %s34
    %p40 = scmp.eq.s32.totalorder %s21, 0
    %p41 = por %p39, %p40
    %p42 = scmp.ne.s32.totalorder %s31, %s34
    %p43 = scmp.eq.s32.totalorder %s26, 1
    %p44 = por %p42, %p43
    %p45 = scmp.ne.s32.totalorder %s34, %s35
    %p46 = scmp.eq.s32.totalorder %s26, 0
    %p47 = por %p45, %p46
    %p48 = scmp.ne.s32.totalorder %s34, %s35
    %p49 = scmp.eq.s32.totalorder %s27, 1
    %p50 = por %p48, %p49
    %p52 = scmp.ne.s32.totalorder %s35, %s51
    %p53 = scmp.eq.s32.totalorder %s27, 0
    %p54 = por %p52, %p53
    %s56 = sadd.s32 %s55, 1
    %p59 = scmp.eq.s32.totalorder %s21, 1
    %p60 = scmp.ne.s32.totalorder %s55, %s57
    %p61 = scmp.eq.s32.totalorder %s21, 0
    %p62 = por %p60, %p61
    %p63 = scmp.ne.s32.totalorder %s55, %s57
    %p64 = scmp.eq.s32.totalorder %s26, 1
    %p65 = por %p63, %p64
    %p66 = scmp.ne.s32.totalorder %s57, %s58
    %p67 = scmp.eq.s32.totalorder %s26, 0
    %p68 = por %p66, %p67
    %p69 = scmp.ne.s32.totalorder %s57, %s58
    %p70 = scmp.eq.s32.totalorder %s27, 1
    %p71 = por %p69, %p70
    %p73 = scmp.ne.s32.totalorder %s58, %s72
    %p74 = scmp.eq.s32.totalorder %s27, 0
    %p75 = por %p73, %p74
    %s77 = sadd.s32 %s76, 1
    %p80 = scmp.eq.s32.totalorder %s21, 1
    %p81 = scmp.ne.s32.totalorder %s76, %s78
    %p82 = scmp.eq.s32.totalorder %s21, 0
    %p83 = por %p81, %p82
    %p84 = scmp.ne.s32.totalorder %s76, %s78
    %p85 = scmp.eq.s32.totalorder %s26, 1
    %p86 = por %p84, %p85
    %p87 = scmp.ne.s32.totalorder %s78, %s79
    %p88 = scmp.eq.s32.totalorder %s26, 0
    %p89 = por %p87, %p88
    %p90 = scmp.ne.s32.totalorder %s78, %s79
    %p91 = scmp.eq.s32.totalorder %s27, 1
    %p92 = por %p90, %p91
    %p94 = scmp.ne.s32.totalorder %s79, %s93
    %p95 = scmp.eq.s32.totalorder %s27, 0
    %p96 = por %p94, %p95
    %s98 = sadd.s32 %s97, 1
    %p101 = scmp.eq.s32.totalorder %s21, 1
    %p102 = scmp.ne.s32.totalorder %s97, %s99
    %p103 = scmp.eq.s32.totalorder %s21, 0
    %p104 = por %p102, %p103
    %p105 = scmp.ne.s32.totalorder %s97, %s99
    %p106 = scmp.eq.s32.totalorder %s26, 1
    %p107 = por %p105, %p106
    %p108 = scmp.ne.s32.totalorder %s99, %s100
    %p109 = scmp.eq.s32.totalorder %s26, 0
    %p110 = por %p108, %p109
    %p111 = scmp.ne.s32.totalorder %s99, %s100
    %p112 = scmp.eq.s32.totalorder %s27, 1
    %p113 = por %p111, %p112
    %p115 = scmp.ne.s32.totalorder %s100, %s114
    %p116 = scmp.eq.s32.totalorder %s27, 0
    %p117 = por %p115, %p116
    %s119 = sadd.s32 %s118, 1
    %p122 = scmp.eq.s32.totalorder %s21, 1
    %p123 = scmp.ne.s32.totalorder %s118, %s120
    %p124 = scmp.eq.s32.totalorder %s21, 0
    %p125 = por %p123, %p124
    %p126 = scmp.ne.s32.totalorder %s118, %s120
    %p127 = scmp.eq.s32.totalorder %s26, 1
    %p128 = por %p126, %p127
    %p129 = scmp.ne.s32.totalorder %s120, %s121
    %p130 = scmp.eq.s32.totalorder %s26, 0
    %p131 = por %p129, %p130
    %p132 = scmp.ne.s32.totalorder %s120, %s121
    %p133 = scmp.eq.s32.totalorder %s27, 1
    %p134 = por %p132, %p133
    %p136 = scmp.ne.s32.totalorder %s121, %s135
    %p137 = scmp.eq.s32.totalorder %s27, 0
    %p138 = por %p136, %p137
    %s140 = sadd.s32 %s139, 1
    %p143 = scmp.eq.s32.totalorder %s21, 1
    %p144 = scmp.ne.s32.totalorder %s139, %s141
    %p145 = scmp.eq.s32.totalorder %s21, 0
    %p146 = por %p144, %p145
    %p147 = scmp.ne.s32.totalorder %s139, %s141
    %p148 = scmp.eq.s32.totalorder %s26, 1
    %p149 = por %p147, %p148
    %p150 = scmp.ne.s32.totalorder %s141, %s142
    %p151 = scmp.eq.s32.totalorder %s26, 0
    %p152 = por %p150, %p151
    %p153 = scmp.ne.s32.totalorder %s141, %s142
    %p154 = scmp.eq.s32.totalorder %s27, 1
    %p155 = por %p153, %p154
    %p157 = scmp.ne.s32.totalorder %s142, %s156
    %p158 = scmp.eq.s32.totalorder %s27, 0
    %p159 = por %p157, %p158
    %s161 = sadd.s32 %s160, 1
    %p164 = scmp.eq.s32.totalorder %s21, 1
    %p165 = scmp.ne.s32.totalorder %s160, %s162
    %p166 = scmp.eq.s32.totalorder %s21, 0
    %p167 = por %p165, %p166
    %p168 = scmp.ne.s32.totalorder %s160, %s162
    %p169 = scmp.eq.s32.totalorder %s26, 1
    %p170 = por %p168, %p169
    %p171 = scmp.ne.s32.totalorder %s162, %s163
    %p172 = scmp.eq.s32.totalorder %s26, 0
    %p173 = por %p171, %p172
    %p174 = scmp.ne.s32.totalorder %s162, %s163
    %p175 = scmp.eq.s32.totalorder %s27, 1
    %p176 = por %p174, %p175
    %p178 = scmp.ne.s32.totalorder %s163, %s177
    %p179 = scmp.eq.s32.totalorder %s27, 0
    %p180 = por %p178, %p179
    %s182 = sadd.s32 %s181, 1
    %p185 = scmp.eq.s32.totalorder %s21, 1
    %p186 = scmp.ne.s32.totalorder %s181, %s183
    %p187 = scmp.eq.s32.totalorder %s21, 0
    %p188 = por %p186, %p187
    %p189 = scmp.ne.s32.totalorder %s181, %s183
    %p190 = scmp.eq.s32.totalorder %s26, 1
    %p191 = por %p189, %p190
    %p192 = scmp.ne.s32.totalorder %s183, %s184
    %p193 = scmp.eq.s32.totalorder %s26, 0
    %p194 = por %p192, %p193
    %p195 = scmp.ne.s32.totalorder %s183, %s184
    %p196 = scmp.eq.s32.totalorder %s27, 1
    %p197 = por %p195, %p196
    %p199 = scmp.ne.s32.totalorder %s184, %s198
    %p200 = scmp.eq.s32.totalorder %s27, 0
    %p201 = por %p199, %p200
    %s203 = sadd.s32 %s202, 1
    %p206 = scmp.eq.s32.totalorder %s21, 1
    %p207 = scmp.ne.s32.totalorder %s202, %s204
    %p208 = scmp.eq.s32.totalorder %s21, 0
    %p209 = por %p207, %p208
    %p210 = scmp.ne.s32.totalorder %s202, %s204
    %p211 = scmp.eq.s32.totalorder %s26, 1
    %p212 = por %p210, %p211
    %p213 = scmp.ne.s32.totalorder %s204, %s205
    %p214 = scmp.eq.s32.totalorder %s26, 0
    %p215 = por %p213, %p214
    %p216 = scmp.ne.s32.totalorder %s204, %s205
    %p217 = scmp.eq.s32.totalorder %s27, 1
    %p218 = por %p216, %p217
    %p220 = scmp.ne.s32.totalorder %s205, %s219
    %p221 = scmp.eq.s32.totalorder %s27, 0
    %p222 = por %p220, %p221
    %s224 = sadd.s32 %s223, 1
    %p227 = scmp.eq.s32.totalorder %s21, 1
    %p228 = scmp.ne.s32.totalorder %s223, %s225
    %p229 = scmp.eq.s32.totalorder %s21, 0
    %p230 = por %p228, %p229
    %p231 = scmp.ne.s32.totalorder %s223, %s225
    %p232 = scmp.eq.s32.totalorder %s26, 1
    %p233 = por %p231, %p232
    %p234 = scmp.ne.s32.totalorder %s225, %s226
    %p235 = scmp.eq.s32.totalorder %s26, 0
    %p236 = por %p234, %p235
    %p237 = scmp.ne.s32.totalorder %s225, %s226
    %p238 = scmp.eq.s32.totalorder %s27, 1
    %p239 = por %p237, %p238
    %p241 = scmp.ne.s32.totalorder %s226, %s240
    %p242 = scmp.eq.s32.totalorder %s27, 0
    %p243 = por %p241, %p242
    %s245 = sadd.s32 %s244, 1
    %p248 = scmp.eq.s32.totalorder %s21, 1
    %p249 = scmp.ne.s32.totalorder %s244, %s246
    %p250 = scmp.eq.s32.totalorder %s21, 0
    %p251 = por %p249, %p250
    %p252 = scmp.ne.s32.totalorder %s244, %s246
    %p253 = scmp.eq.s32.totalorder %s26, 1
    %p254 = por %p252, %p253
    %p255 = scmp.ne.s32.totalorder %s246, %s247
    %p256 = scmp.eq.s32.totalorder %s26, 0
    %p257 = por %p255, %p256
    %p258 = scmp.ne.s32.totalorder %s246, %s247
    %p259 = scmp.eq.s32.totalorder %s27, 1
    %p260 = por %p258, %p259
    %p262 = scmp.ne.s32.totalorder %s247, %s261
    %p263 = scmp.eq.s32.totalorder %s27, 0
    %p264 = por %p262, %p263
    %s266 = sadd.s32 %s265, 1
    %p269 = scmp.eq.s32.totalorder %s21, 1
    %p270 = scmp.ne.s32.totalorder %s265, %s267
    %p271 = scmp.eq.s32.totalorder %s21, 0
    %p272 = por %p270, %p271
    %p273 = scmp.ne.s32.totalorder %s265, %s267
    %p274 = scmp.eq.s32.totalorder %s26, 1
    %p275 = por %p273, %p274
    %p276 = scmp.ne.s32.totalorder %s267, %s268
    %p277 = scmp.eq.s32.totalorder %s26, 0
    %p278 = por %p276, %p277
    %p279 = scmp.ne.s32.totalorder %s267, %s268
    %p280 = scmp.eq.s32.totalorder %s27, 1
    %p281 = por %p279, %p280
    %p283 = scmp.ne.s32.totalorder %s268, %s282
    %p284 = scmp.eq.s32.totalorder %s27, 0
    %p285 = por %p283, %p284
    %s287 = sadd.s32 %s286, 1
    %p290 = scmp.eq.s32.totalorder %s21, 1
    %p291 = scmp.ne.s32.totalorder %s286, %s288
    %p292 = scmp.eq.s32.totalorder %s21, 0
    %p293 = por %p291, %p292
    %p294 = scmp.ne.s32.totalorder %s286, %s288
    %p295 = scmp.eq.s32.totalorder %s26, 1
    %p296 = por %p294, %p295
    %p297 = scmp.ne.s32.totalorder %s288, %s289
    %p298 = scmp.eq.s32.totalorder %s26, 0
    %p299 = por %p297, %p298
    %p300 = scmp.ne.s32.totalorder %s288, %s289
    %p301 = scmp.eq.s32.totalorder %s27, 1
    %p302 = por %p300, %p301
    %p304 = scmp.ne.s32.totalorder %s289, %s303
    %p305 = scmp.eq.s32.totalorder %s27, 0
    %p306 = por %p304, %p305
    %s308 = sadd.s32 %s307, 1
    %p311 = scmp.eq.s32.totalorder %s21, 1
    %p312 = scmp.ne.s32.totalorder %s307, %s309
    %p313 = scmp.eq.s32.totalorder %s21, 0
    %p314 = por %p312, %p313
    %p315 = scmp.ne.s32.totalorder %s307, %s309
    %p316 = scmp.eq.s32.totalorder %s26, 1
    %p317 = por %p315, %p316
    %p318 = scmp.ne.s32.totalorder %s309, %s310
    %p319 = scmp.eq.s32.totalorder %s26, 0
    %p320 = por %p318, %p319
    %p321 = scmp.ne.s32.totalorder %s309, %s310
    %p322 = scmp.eq.s32.totalorder %s27, 1
    %p323 = por %p321, %p322
    %p325 = scmp.ne.s32.totalorder %s310, %s324
    %p326 = scmp.eq.s32.totalorder %s27, 0
    %p327 = por %p325, %p326
    %s329 = sadd.s32 %s328, 1
    %p332 = scmp.eq.s32.totalorder %s21, 1
    %p333 = scmp.ne.s32.totalorder %s328, %s330
    %p334 = scmp.eq.s32.totalorder %s21, 0
    %p335 = por %p333, %p334
    %p336 = scmp.ne.s32.totalorder %s328, %s330
    %p337 = scmp.eq.s32.totalorder %s26, 1
    %p338 = por %p336, %p337
    %p339 = scmp.ne.s32.totalorder %s330, %s331
    %p340 = scmp.eq.s32.totalorder %s26, 0
    %p341 = por %p339, %p340
    %p342 = scmp.ne.s32.totalorder %s330, %s331
    %p343 = scmp.eq.s32.totalorder %s27, 1
    %p344 = por %p342, %p343
    %p346 = scmp.ne.s32.totalorder %s331, %s345
    %p347 = scmp.eq.s32.totalorder %s27, 0
    %p348 = por %p346, %p347
    %s349 = ssub.s32 %s21, %s28
    %p350 = scmp.eq.s32.totalorder %s349, 0
    %s352 = sadd.s32 %s351, 1
    %s353 = scalar_select %p350, %s351, %s352
    %p356 = pneg %p350
    %p357 = scmp.eq.s32.totalorder %s21, 1
    %p358 = por %p356, %p357
    %p359 = scmp.ne.s32.totalorder %s351, %s354
    %p360 = scmp.eq.s32.totalorder %s21, 0
    %p361 = por %p359, %p360
    %p362 = scmp.ne.s32.totalorder %s351, %s354
    %p363 = scmp.eq.s32.totalorder %s26, 1
    %p364 = por %p362, %p363
    %p365 = scmp.ne.s32.totalorder %s354, %s355
    %p366 = scmp.eq.s32.totalorder %s26, 0
    %p367 = por %p365, %p366
    %p368 = scmp.ne.s32.totalorder %s354, %s355
    %p369 = scmp.eq.s32.totalorder %s27, 1
    %p370 = por %p368, %p369
    %p372 = scmp.ne.s32.totalorder %s355, %s371
    %p373 = scmp.eq.s32.totalorder %s27, 0
    %p374 = por %p372, %p373
    %p375 = scmp.le.s32.totalorder 1, %s21
    %p376 = scmp.lt.s32.totalorder %s21, 3
    %p377 = pnand %p375, %p376
    %p378 = pneg %p377
    // Predicated region
    $region9: #{aspp_forward.1} parent=5 // pred_check
      _
    $region10: #{aspp_forward.1} parent=5 // pred_check_branch
      %380 = sbr.rel (%p377) target = $region12
    $region11: #{aspp_forward.1} parent=5 // pred_region
      %s381 = ssub.s32 %s21, 1
      // Predicated region
      $region13: #{aspp_forward.1} parent=11 // pred_check
        %p382 = pneg %p68
      $region14: #{aspp_forward.1} parent=11 // pred_check_branch
        %384 = sbr.rel (%p382) target = $region16
      $region15: #{aspp_forward.1} parent=11 // pred_region
        _
      $region16: #{aspp_forward.1} parent=11 // pred_fallthru
        _
      // Predicated region
      $region17: #{aspp_forward.1} parent=11 // pred_check
        %p385 = pneg %p89
      $region18: #{aspp_forward.1} parent=11 // pred_check_branch
        %387 = sbr.rel (%p385) target = $region20
      $region19: #{aspp_forward.1} parent=11 // pred_region
        _
      $region20: #{aspp_forward.1} parent=11 // pred_fallthru
        _
      // Predicated region
      $region21: #{aspp_forward.1} parent=11 // pred_check
        %p388 = pneg %p110
      $region22: #{aspp_forward.1} parent=11 // pred_check_branch
        %390 = sbr.rel (%p388) target = $region24
      $region23: #{aspp_forward.1} parent=11 // pred_region
        _
      $region24: #{aspp_forward.1} parent=11 // pred_fallthru
        _
      // Predicated region
      $region25: #{aspp_forward.1} parent=11 // pred_check
        %p391 = pneg %p131
      $region26: #{aspp_forward.1} parent=11 // pred_check_branch
        %393 = sbr.rel (%p391) target = $region28
      $region27: #{aspp_forward.1} parent=11 // pred_region
        _
      $region28: #{aspp_forward.1} parent=11 // pred_fallthru
        _
      // Predicated region
      $region29: #{aspp_forward.1} parent=11 // pred_check
        %p394 = pneg %p152
      $region30: #{aspp_forward.1} parent=11 // pred_check_branch
        %396 = sbr.rel (%p394) target = $region32
      $region31: #{aspp_forward.1} parent=11 // pred_region
        _
      $region32: #{aspp_forward.1} parent=11 // pred_fallthru
        _
      // Predicated region
      $region33: #{aspp_forward.1} parent=11 // pred_check
        %p397 = pneg %p173
      $region34: #{aspp_forward.1} parent=11 // pred_check_branch
        %399 = sbr.rel (%p397) target = $region36
      $region35: #{aspp_forward.1} parent=11 // pred_region
        _
      $region36: #{aspp_forward.1} parent=11 // pred_fallthru
        _
      // Predicated region
      $region37: #{aspp_forward.1} parent=11 // pred_check
        %p400 = pneg %p194
      $region38: #{aspp_forward.1} parent=11 // pred_check_branch
        %402 = sbr.rel (%p400) target = $region40
      $region39: #{aspp_forward.1} parent=11 // pred_region
        _
      $region40: #{aspp_forward.1} parent=11 // pred_fallthru
        _
      // Predicated region
      $region41: #{aspp_forward.1} parent=11 // pred_check
        %p403 = pneg %p215
      $region42: #{aspp_forward.1} parent=11 // pred_check_branch
        %405 = sbr.rel (%p403) target = $region44
      $region43: #{aspp_forward.1} parent=11 // pred_region
        _
      $region44: #{aspp_forward.1} parent=11 // pred_fallthru
        _
      // Predicated region
      $region45: #{aspp_forward.1} parent=11 // pred_check
        %p406 = pneg %p236
      $region46: #{aspp_forward.1} parent=11 // pred_check_branch
        %408 = sbr.rel (%p406) target = $region48
      $region47: #{aspp_forward.1} parent=11 // pred_region
        _
      $region48: #{aspp_forward.1} parent=11 // pred_fallthru
        _
      // Predicated region
      $region49: #{aspp_forward.1} parent=11 // pred_check
        %p409 = pneg %p257
      $region50: #{aspp_forward.1} parent=11 // pred_check_branch
        %411 = sbr.rel (%p409) target = $region52
      $region51: #{aspp_forward.1} parent=11 // pred_region
        _
      $region52: #{aspp_forward.1} parent=11 // pred_fallthru
        _
      // Predicated region
      $region53: #{aspp_forward.1} parent=11 // pred_check
        %p412 = pneg %p278
      $region54: #{aspp_forward.1} parent=11 // pred_check_branch
        %414 = sbr.rel (%p412) target = $region56
      $region55: #{aspp_forward.1} parent=11 // pred_region
        _
      $region56: #{aspp_forward.1} parent=11 // pred_fallthru
        _
      // Predicated region
      $region57: #{aspp_forward.1} parent=11 // pred_check
        %p415 = pneg %p299
      $region58: #{aspp_forward.1} parent=11 // pred_check_branch
        %417 = sbr.rel (%p415) target = $region60
      $region59: #{aspp_forward.1} parent=11 // pred_region
        _
      $region60: #{aspp_forward.1} parent=11 // pred_fallthru
        _
      // Predicated region
      $region61: #{aspp_forward.1} parent=11 // pred_check
        %p418 = pneg %p320
      $region62: #{aspp_forward.1} parent=11 // pred_check_branch
        %420 = sbr.rel (%p418) target = $region64
      $region63: #{aspp_forward.1} parent=11 // pred_region
        _
      $region64: #{aspp_forward.1} parent=11 // pred_fallthru
        _
      // Predicated region
      $region65: #{aspp_forward.1} parent=11 // pred_check
        %p421 = pneg %p341
      $region66: #{aspp_forward.1} parent=11 // pred_check_branch
        %423 = sbr.rel (%p421) target = $region68
      $region67: #{aspp_forward.1} parent=11 // pred_region
        _
      $region68: #{aspp_forward.1} parent=11 // pred_fallthru
        _
    $region12: #{aspp_forward.1} parent=5 // pred_fallthru
      _
    %p424 = scmp.lt.s32.totalorder %s21, 2
    // Predicated region
    $region69: #{aspp_forward.1} parent=5 // pred_check
      %p425 = pneg %p424
    $region70: #{aspp_forward.1} parent=5 // pred_check_branch
      %427 = sbr.rel (%p425) target = $region72
    $region71: #{aspp_forward.1} parent=5 // pred_region
      // Predicated region
      $region73: #{aspp_forward.1} parent=71 // pred_check
        %p428 = pneg %p41
      $region74: #{aspp_forward.1} parent=71 // pred_check_branch
        %430 = sbr.rel (%p428) target = $region76
      $region75: #{aspp_forward.1} parent=71 // pred_region
        %p431 = scmp.lt.s32.totalorder %s21, 1
        %s432 = scalar_select %p431, %s21, 1
        %s433 = smul.addr %s432, 2
        %s434 = smul.addr %s433, 8
        %s435 = scalar_lea.vmem %s0, %s434
      $region76: #{aspp_forward.1} parent=71 // pred_fallthru
        _
    $region72: #{aspp_forward.1} parent=5 // pred_fallthru
      _
    %p436 = scmp.le.s32.totalorder 1, %s21
    %p437 = scmp.lt.s32.totalorder %s21, 3
    %p438 = pnand %p436, %p437
    %p439 = pneg %p438
    // Predicated region
    $region77: #{aspp_forward.1} parent=5 // pred_check
      _
    $region78: #{aspp_forward.1} parent=5 // pred_check_branch
      %441 = sbr.rel (%p438) target = $region80
    $region79: #{aspp_forward.1} parent=5 // pred_region
      %s442 = ssub.s32 %s21, 1
      %p443 = scmp.lt.s32.totalorder %s26, 1
      %s444 = scalar_select %p443, %s26, 1
      %s445 = smul.addr %s444, 2
      %s446 = smul.addr %s445, 8
      %s447 = scalar_lea.vmem %s0, %s446
      %p448 = pneg %p47
      %p449 = pneg %p44
      %p450 = pneg %p68
      %p451 = pneg %p65
      %p452 = pneg %p89
      %p453 = pneg %p86
      %p454 = pneg %p110
      %p455 = pneg %p107
      %p456 = pneg %p131
      %p457 = pneg %p128
      %p458 = pneg %p152
      %p459 = pneg %p149
      %p460 = pneg %p173
      %p461 = pneg %p170
      %p462 = pneg %p194
      %p463 = pneg %p191
      %p464 = pneg %p215
      %p465 = pneg %p212
      %p466 = pneg %p236
      %p467 = pneg %p233
      %p468 = pneg %p257
      %p469 = pneg %p254
      %p470 = pneg %p278
      %p471 = pneg %p275
      %p472 = pneg %p299
      %p473 = pneg %p296
      %p474 = pneg %p320
      %p475 = pneg %p317
      %p476 = pneg %p341
      %p477 = pneg %p338
      %p478 = pneg %p367
      %p479 = pneg %p364
      %p480 = scmp.lt.s32.totalorder %s26, 1
      %s481 = scalar_select %p480, %s26, 1
      %s482 = smul.addr %s481, 2
      %s483 = smul.addr %s482, 8
      %s484 = scalar_lea.vmem %s15, %s483
      %p485 = scmp.lt.s32.totalorder %s26, 1
      %s486 = scalar_select %p485, %s26, 1
      %s487 = smul.addr %s486, 2
      %s488 = smul.addr %s487, 8
      %s489 = scalar_lea.vmem %s0, %s488
      %p490 = scmp.lt.s32.totalorder %s26, 1
      %s491 = scalar_select %p490, %s26, 1
      %s492 = smul.addr %s491, 2
      %s493 = smul.addr %s492, 8
      %s494 = scalar_lea.vmem %s15, %s493
      %v495 = vld [vmem:[%s489] sm:$0xff]
      %v496 = vld [vmem:[%s489 + $0x8] sm:$0xff]
      %497 = vrot.lane.b32.xlu0 %v495, 17
      %v498 = vpop.permute.xlu0 %497
      %499 = vrot.lane.b32.xlu0 %v496, 17
      %v500 = vpop.permute.xlu0 %499
      %v501 = vlaneseq
      %v502 = vand.u32 %v501, 127
      %vm503 = vcmp.lt.s32.totalorder %v502, 17
      %v504 = vsel %vm503, %v498, %v500
      %v505 = vsel %vm503, %v500, %v498
      %v506 = vld [vmem:[%s1] ss:$8 sm:$0x3]
      %v508 = vperm.slane %v506, 0
      %v509 = vperm.slane %v506, 1
      %v512 = vmul.f32 %v505, %v508
      %v513 = vmul.f32 %v504, %v509
      %514 = vrot.lane.b32.xlu0 %v495, 16
      %v515 = vpop.permute.xlu0 %514
      %516 = vrot.lane.b32.xlu0 %v496, 16
      %v517 = vpop.permute.xlu0 %516
      %vm518 = vcmp.lt.s32.totalorder %v502, 16
      %v519 = vsel %vm518, %v515, %v517
      %v520 = vsel %vm518, %v517, %v515
      %s521 = scalar_lea.vmem %s1, 1
      %v522 = vld [vmem:[%s521] ss:$8 sm:$0x3]
      %v524 = vperm.slane %v522, 0
      %v525 = vperm.slane %v522, 1
      %v528 = vmul.f32 %v520, %v524
      %v529 = vmul.f32 %v519, %v525
      %530 = vrot.lane.b32.xlu0 %v495, 15
      %v531 = vpop.permute.xlu0 %530
      %532 = vrot.lane.b32.xlu0 %v496, 15
      %v533 = vpop.permute.xlu0 %532
      %vm534 = vcmp.lt.s32.totalorder %v502, 15
      %v535 = vsel %vm534, %v531, %v533
      %v536 = vsel %vm534, %v533, %v531
      %s537 = scalar_lea.vmem %s1, 2
      %v538 = vld [vmem:[%s537] ss:$8 sm:$0x3]
      %v540 = vperm.slane %v538, 0
      %v541 = vperm.slane %v538, 1
      %v544 = vmul.f32 %v536, %v540
      %v545 = vmul.f32 %v535, %v541
      %546 = vrot.lane.b32.xlu0 %v495, 1
      %v547 = vpop.permute.xlu0 %546
      %548 = vrot.lane.b32.xlu0 %v496, 1
      %v549 = vpop.permute.xlu0 %548
      %vm550 = vcmp.lt.s32.totalorder %v502, 1
      %v551 = vsel %vm550, %v547, %v549
      %v552 = vsel %vm550, %v549, %v547
      %s553 = scalar_lea.vmem %s1, 3
      %v554 = vld [vmem:[%s553] ss:$8 sm:$0x3]
      %v556 = vperm.slane %v554, 0
      %v557 = vperm.slane %v554, 1
      %v560 = vmul.f32 %v552, %v556
      %v561 = vmul.f32 %v551, %v557
      %562 = vrot.lane.b32.xlu0 %v495, 127
      %v563 = vpop.permute.xlu0 %562
      %564 = vrot.lane.b32.xlu0 %v496, 127
      %v565 = vpop.permute.xlu0 %564
      %vm566 = vcmp.lt.s32.totalorder %v502, 127
      %v567 = vsel %vm566, %v563, %v565
      %v568 = vsel %vm566, %v565, %v563
      %s569 = scalar_lea.vmem %s1, 5
      %v570 = vld [vmem:[%s569] ss:$8 sm:$0x3]
      %v572 = vperm.slane %v570, 0
      %v573 = vperm.slane %v570, 1
      %v576 = vmul.f32 %v567, %v572
      %v577 = vmul.f32 %v568, %v573
      %578 = vrot.lane.b32.xlu0 %v495, 113
      %v579 = vpop.permute.xlu0 %578
      %580 = vrot.lane.b32.xlu0 %v496, 113
      %v581 = vpop.permute.xlu0 %580
      %vm582 = vcmp.lt.s32.totalorder %v502, 113
      %v583 = vsel %vm582, %v579, %v581
      %v584 = vsel %vm582, %v581, %v579
      %s585 = scalar_lea.vmem %s1, 6
      %v586 = vld [vmem:[%s585] ss:$8 sm:$0x3]
      %v588 = vperm.slane %v586, 0
      %v589 = vperm.slane %v586, 1
      %v592 = vmul.f32 %v583, %v588
      %v593 = vmul.f32 %v584, %v589
      %594 = vrot.lane.b32.xlu0 %v495, 112
      %v595 = vpop.permute.xlu0 %594
      %596 = vrot.lane.b32.xlu0 %v496, 112
      %v597 = vpop.permute.xlu0 %596
      %vm598 = vcmp.lt.s32.totalorder %v502, 112
      %v599 = vsel %vm598, %v595, %v597
      %v600 = vsel %vm598, %v597, %v595
      %s601 = scalar_lea.vmem %s1, 7
      %v602 = vld [vmem:[%s601] ss:$8 sm:$0x3]
      %v604 = vperm.slane %v602, 0
      %v605 = vperm.slane %v602, 1
      %v608 = vmul.f32 %v599, %v604
      %v609 = vmul.f32 %v600, %v605
      %610 = vrot.lane.b32.xlu0 %v495, 111
      %v611 = vpop.permute.xlu0 %610
      %612 = vrot.lane.b32.xlu0 %v496, 111
      %v613 = vpop.permute.xlu0 %612
      %vm614 = vcmp.lt.s32.totalorder %v502, 111
      %v615 = vsel %vm614, %v611, %v613
      %v616 = vsel %vm614, %v613, %v611
      %s617 = scalar_lea.vmem %s1, 16
      %v618 = vld [vmem:[%s617] ss:$8 sm:$0x3]
      %v620 = vperm.slane %v618, 0
      %v621 = vperm.slane %v618, 1
      %v624 = vmul.f32 %v615, %v620
      %v625 = vmul.f32 %v616, %v621
      %v626 = vld [vmem:[%s2] sm:$0xff]
      %v627 = vld [vmem:[%s3] sm:$0xff]
      %629 = vset.pattern.permute.xlu0 0
      %630 = vperm.xlu0 %629, %v627
      %v631 = vpop.permute.xlu0 %630
      %vm633 = vcmask 588800
      %v635 = vsel %vm633, %v626, 0
      %637 = vmatpush.msra.mxu0 0.0
      %638 = vmatpush.msra.mxu0 0.0
      %639 = vmatpush.msra.mxu0 0.0
      %640 = vmatpush.msra.mxu0 0.0
      %641 = vmatpush.msra.mxu0 0.0
      %642 = vmatpush.msra.mxu0 0.0
      %643 = vmatpush.msra.mxu0 0.0
      %644 = vmatpush.msra.mxu0 %v624
      %645 = vmatpush.msra.mxu0 %v608
      %646 = vmatpush.msra.mxu0 %v592
      %647 = vmatpush.msra.mxu0 %v576
      %648 = vmatpush.msra.mxu0 %v495
      %649 = vmatpush.msra.mxu0 %v560
      %650 = vmatpush.msra.mxu0 %v544
      %651 = vmatpush.msra.mxu0 %v528
      %652 = vmatpush.msra.mxu0 %v512
      %653 = vmatmul.f32.gmra.mxu0 %v635
      %v654 = vpop.f32.mrf.mxu0
      %v655 = vadd.f32 %v631, %v654
      %656 = vdwg.mxu0
      %657 = vmatpush.msra.mxu0 0.0
      %658 = vmatpush.msra.mxu0 0.0
      %659 = vmatpush.msra.mxu0 0.0
      %660 = vmatpush.msra.mxu0 0.0
      %661 = vmatpush.msra.mxu0 0.0
      %662 = vmatpush.msra.mxu0 0.0
      %663 = vmatpush.msra.mxu0 0.0
      %664 = vmatpush.msra.mxu0 %v625
      %665 = vmatpush.msra.mxu0 %v609
      %666 = vmatpush.msra.mxu0 %v593
      %667 = vmatpush.msra.mxu0 %v577
      %668 = vmatpush.msra.mxu0 %v496
      %669 = vmatpush.msra.mxu0 %v561
      %670 = vmatpush.msra.mxu0 %v545
      %671 = vmatpush.msra.mxu0 %v529
      %672 = vmatpush.msra.mxu0 %v513
      %673 = vmatmul.f32.gmra.mxu0 %v635
      %v674 = vpop.f32.mrf.mxu0
      %v675 = vadd.f32 %v631, %v674
      %676 = vdwg.mxu0
      %v677 = vld [vmem:[%s4] sm:$0xff]
      %vm678 = vcmp.ge.f32.partialorder %v655, 0.0
      %vm679 = vcmp.ge.f32.partialorder %v675, 0.0
      %681 = vset.pattern.permute.xlu0 0
      %682 = vperm.xlu0 %681, %v677
      %v683 = vpop.permute.xlu0 %682
      %v685 = vmul.f32 %v655, %v683
      %v686 = vmul.f32 %v675, %v683
      %v687 = vsel %vm678, %v655, %v685
      %v688 = vsel %vm679, %v675, %v686
      %689 = vrot.lane.b32.xlu0 %v687, 34
      %v690 = vpop.permute.xlu0 %689
      %691 = vrot.lane.b32.xlu0 %v688, 34
      %v692 = vpop.permute.xlu0 %691
      %vm693 = vcmp.lt.s32.totalorder %v502, 34
      %v694 = vsel %vm693, %v690, %v692
      %v695 = vsel %vm693, %v692, %v690
      %s696 = scalar_lea.vmem %s1, 17
      %v697 = vld [vmem:[%s696] ss:$8 sm:$0x3]
      %v699 = vperm.slane %v697, 0
      %v700 = vperm.slane %v697, 1
      %v703 = vmul.f32 %v695, %v699
      %v704 = vmul.f32 %v694, %v700
      %705 = vrot.lane.b32.xlu0 %v687, 32
      %v706 = vpop.permute.xlu0 %705
      %707 = vrot.lane.b32.xlu0 %v688, 32
      %v708 = vpop.permute.xlu0 %707
      %vm709 = vcmp.lt.s32.totalorder %v502, 32
      %v710 = vsel %vm709, %v706, %v708
      %v711 = vsel %vm709, %v708, %v706
      %s712 = scalar_lea.vmem %s1, 18
      %v713 = vld [vmem:[%s712] ss:$8 sm:$0x3]
      %v715 = vperm.slane %v713, 0
      %v716 = vperm.slane %v713, 1
      %v719 = vmul.f32 %v711, %v715
      %v720 = vmul.f32 %v710, %v716
      %721 = vrot.lane.b32.xlu0 %v687, 30
      %v722 = vpop.permute.xlu0 %721
      %723 = vrot.lane.b32.xlu0 %v688, 30
      %v724 = vpop.permute.xlu0 %723
      %vm725 = vcmp.lt.s32.totalorder %v502, 30
      %v726 = vsel %vm725, %v722, %v724
      %v727 = vsel %vm725, %v724, %v722
      %s728 = scalar_lea.vmem %s1, 19
      %v729 = vld [vmem:[%s728] ss:$8 sm:$0x3]
      %v731 = vperm.slane %v729, 0
      %v732 = vperm.slane %v729, 1
      %v735 = vmul.f32 %v727, %v731
      %v736 = vmul.f32 %v726, %v732
      %737 = vrot.lane.b32.xlu0 %v687, 2
      %v738 = vpop.permute.xlu0 %737
      %739 = vrot.lane.b32.xlu0 %v688, 2
      %v740 = vpop.permute.xlu0 %739
      %vm741 = vcmp.lt.s32.totalorder %v502, 2
      %v742 = vsel %vm741, %v738, %v740
      %v743 = vsel %vm741, %v740, %v738
      %s744 = scalar_lea.vmem %s1, 20
      %v745 = vld [vmem:[%s744] ss:$8 sm:$0x3]
      %v747 = vperm.slane %v745, 0
      %v748 = vperm.slane %v745, 1
      %v751 = vmul.f32 %v743, %v747
      %v752 = vmul.f32 %v742, %v748
      %753 = vrot.lane.b32.xlu0 %v687, 126
      %v754 = vpop.permute.xlu0 %753
      %755 = vrot.lane.b32.xlu0 %v688, 126
      %v756 = vpop.permute.xlu0 %755
      %vm757 = vcmp.lt.s32.totalorder %v502, 126
      %v758 = vsel %vm757, %v754, %v756
      %v759 = vsel %vm757, %v756, %v754
      %s760 = scalar_lea.vmem %s1, 22
      %v761 = vld [vmem:[%s760] ss:$8 sm:$0x3]
      %v763 = vperm.slane %v761, 0
      %v764 = vperm.slane %v761, 1
      %v767 = vmul.f32 %v758, %v763
      %v768 = vmul.f32 %v759, %v764
      %769 = vrot.lane.b32.xlu0 %v687, 98
      %v770 = vpop.permute.xlu0 %769
      %771 = vrot.lane.b32.xlu0 %v688, 98
      %v772 = vpop.permute.xlu0 %771
      %vm773 = vcmp.lt.s32.totalorder %v502, 98
      %v774 = vsel %vm773, %v770, %v772
      %v775 = vsel %vm773, %v772, %v770
      %s776 = scalar_lea.vmem %s1, 23
      %v777 = vld [vmem:[%s776] ss:$8 sm:$0x3]
      %v779 = vperm.slane %v777, 0
      %v780 = vperm.slane %v777, 1
      %v783 = vmul.f32 %v774, %v779
      %v784 = vmul.f32 %v775, %v780
      %785 = vrot.lane.b32.xlu0 %v687, 96
      %v786 = vpop.permute.xlu0 %785
      %787 = vrot.lane.b32.xlu0 %v688, 96
      %v788 = vpop.permute.xlu0 %787
      %vm789 = vcmp.lt.s32.totalorder %v502, 96
      %v790 = vsel %vm789, %v786, %v788
      %v791 = vsel %vm789, %v788, %v786
      %s792 = scalar_lea.vmem %s1, 32
      %v793 = vld [vmem:[%s792] ss:$8 sm:$0x3]
      %v795 = vperm.slane %v793, 0
      %v796 = vperm.slane %v793, 1
      %v799 = vmul.f32 %v790, %v795
      %v800 = vmul.f32 %v791, %v796
      %801 = vrot.lane.b32.xlu0 %v687, 94
      %v802 = vpop.permute.xlu0 %801
      %803 = vrot.lane.b32.xlu0 %v688, 94
      %v804 = vpop.permute.xlu0 %803
      %vm805 = vcmp.lt.s32.totalorder %v502, 94
      %v806 = vsel %vm805, %v802, %v804
      %v807 = vsel %vm805, %v804, %v802
      %s808 = scalar_lea.vmem %s1, 33
      %v809 = vld [vmem:[%s808] ss:$8 sm:$0x3]
      %v811 = vperm.slane %v809, 0
      %v812 = vperm.slane %v809, 1
      %v815 = vmul.f32 %v806, %v811
      %v816 = vmul.f32 %v807, %v812
      %817 = vrot.lane.b32.xlu0 %v687, 68
      %v818 = vpop.permute.xlu0 %817
      %819 = vrot.lane.b32.xlu0 %v688, 68
      %v820 = vpop.permute.xlu0 %819
      %vm821 = vcmp.lt.s32.totalorder %v502, 68
      %v822 = vsel %vm821, %v818, %v820
      %v823 = vsel %vm821, %v820, %v818
      %s824 = scalar_lea.vmem %s1, 34
      %v825 = vld [vmem:[%s824] ss:$8 sm:$0x3]
      %v827 = vperm.slane %v825, 0
      %v828 = vperm.slane %v825, 1
      %v831 = vmul.f32 %v823, %v827
      %v832 = vmul.f32 %v822, %v828
      %833 = vrot.lane.b32.xlu0 %v687, 64
      %v834 = vpop.permute.xlu0 %833
      %835 = vrot.lane.b32.xlu0 %v688, 64
      %v836 = vpop.permute.xlu0 %835
      %vm837 = vcmp.lt.s32.totalorder %v502, 64
      %v838 = vsel %vm837, %v834, %v836
      %v839 = vsel %vm837, %v836, %v834
      %s840 = scalar_lea.vmem %s1, 35
      %v841 = vld [vmem:[%s840] ss:$8 sm:$0x3]
      %v843 = vperm.slane %v841, 0
      %v844 = vperm.slane %v841, 1
      %v847 = vmul.f32 %v839, %v843
      %v848 = vmul.f32 %v838, %v844
      %849 = vrot.lane.b32.xlu0 %v687, 60
      %v850 = vpop.permute.xlu0 %849
      %851 = vrot.lane.b32.xlu0 %v688, 60
      %v852 = vpop.permute.xlu0 %851
      %vm853 = vcmp.lt.s32.totalorder %v502, 60
      %v854 = vsel %vm853, %v850, %v852
      %v855 = vsel %vm853, %v852, %v850
      %s856 = scalar_lea.vmem %s1, 36
      %v857 = vld [vmem:[%s856] ss:$8 sm:$0x3]
      %v859 = vperm.slane %v857, 0
      %v860 = vperm.slane %v857, 1
      %v863 = vmul.f32 %v855, %v859
      %v864 = vmul.f32 %v854, %v860
      %865 = vrot.lane.b32.xlu0 %v687, 4
      %v866 = vpop.permute.xlu0 %865
      %867 = vrot.lane.b32.xlu0 %v688, 4
      %v868 = vpop.permute.xlu0 %867
      %vm869 = vcmp.lt.s32.totalorder %v502, 4
      %v870 = vsel %vm869, %v866, %v868
      %v871 = vsel %vm869, %v868, %v866
      %s872 = scalar_lea.vmem %s1, 37
      %v873 = vld [vmem:[%s872] ss:$8 sm:$0x3]
      %v875 = vperm.slane %v873, 0
      %v876 = vperm.slane %v873, 1
      %v879 = vmul.f32 %v871, %v875
      %v880 = vmul.f32 %v870, %v876
      %881 = vrot.lane.b32.xlu0 %v687, 124
      %v882 = vpop.permute.xlu0 %881
      %883 = vrot.lane.b32.xlu0 %v688, 124
      %v884 = vpop.permute.xlu0 %883
      %vm885 = vcmp.lt.s32.totalorder %v502, 124
      %v886 = vsel %vm885, %v882, %v884
      %v887 = vsel %vm885, %v884, %v882
      %s888 = scalar_lea.vmem %s1, 39
      %v889 = vld [vmem:[%s888] ss:$8 sm:$0x3]
      %v891 = vperm.slane %v889, 0
      %v892 = vperm.slane %v889, 1
      %v895 = vmul.f32 %v886, %v891
      %v896 = vmul.f32 %v887, %v892
      %s897 = scalar_lea.vmem %s1, 48
      %v898 = vld [vmem:[%s897] ss:$8 sm:$0x3]
      %v900 = vperm.slane %v898, 0
      %v901 = vperm.slane %v898, 1
      %v904 = vmul.f32 %v822, %v900
      %v905 = vmul.f32 %v823, %v901
      %s906 = scalar_lea.vmem %s1, 49
      %v907 = vld [vmem:[%s906] ss:$8 sm:$0x3]
      %v909 = vperm.slane %v907, 0
      %v910 = vperm.slane %v907, 1
      %v913 = vmul.f32 %v838, %v909
      %v914 = vmul.f32 %v839, %v910
      %s915 = scalar_lea.vmem %s1, 50
      %v916 = vld [vmem:[%s915] ss:$8 sm:$0x3]
      %v918 = vperm.slane %v916, 0
      %v919 = vperm.slane %v916, 1
      %v922 = vmul.f32 %v854, %v918
      %v923 = vmul.f32 %v855, %v919
      %924 = vrot.lane.b32.xlu0 %v687, 102
      %v925 = vpop.permute.xlu0 %924
      %926 = vrot.lane.b32.xlu0 %v688, 102
      %v927 = vpop.permute.xlu0 %926
      %vm928 = vcmp.lt.s32.totalorder %v502, 102
      %v929 = vsel %vm928, %v925, %v927
      %v930 = vsel %vm928, %v927, %v925
      %s931 = scalar_lea.vmem %s1, 51
      %v932 = vld [vmem:[%s931] ss:$8 sm:$0x3]
      %v934 = vperm.slane %v932, 0
      %v935 = vperm.slane %v932, 1
      %v938 = vmul.f32 %v930, %v934
      %v939 = vmul.f32 %v929, %v935
      %s940 = scalar_lea.vmem %s1, 52
      %v941 = vld [vmem:[%s940] ss:$8 sm:$0x3]
      %v943 = vperm.slane %v941, 0
      %v944 = vperm.slane %v941, 1
      %v947 = vmul.f32 %v791, %v943
      %v948 = vmul.f32 %v790, %v944
      %949 = vrot.lane.b32.xlu0 %v687, 90
      %v950 = vpop.permute.xlu0 %949
      %951 = vrot.lane.b32.xlu0 %v688, 90
      %v952 = vpop.permute.xlu0 %951
      %vm953 = vcmp.lt.s32.totalorder %v502, 90
      %v954 = vsel %vm953, %v950, %v952
      %v955 = vsel %vm953, %v952, %v950
      %s956 = scalar_lea.vmem %s1, 53
      %v957 = vld [vmem:[%s956] ss:$8 sm:$0x3]
      %v959 = vperm.slane %v957, 0
      %v960 = vperm.slane %v957, 1
      %v963 = vmul.f32 %v955, %v959
      %v964 = vmul.f32 %v954, %v960
      %965 = vrot.lane.b32.xlu0 %v687, 6
      %v966 = vpop.permute.xlu0 %965
      %967 = vrot.lane.b32.xlu0 %v688, 6
      %v968 = vpop.permute.xlu0 %967
      %vm969 = vcmp.lt.s32.totalorder %v502, 6
      %v970 = vsel %vm969, %v966, %v968
      %v971 = vsel %vm969, %v968, %v966
      %s972 = scalar_lea.vmem %s1, 54
      %v973 = vld [vmem:[%s972] ss:$8 sm:$0x3]
      %v975 = vperm.slane %v973, 0
      %v976 = vperm.slane %v973, 1
      %v979 = vmul.f32 %v971, %v975
      %v980 = vmul.f32 %v970, %v976
      %981 = vrot.lane.b32.xlu0 %v687, 122
      %v982 = vpop.permute.xlu0 %981
      %983 = vrot.lane.b32.xlu0 %v688, 122
      %v984 = vpop.permute.xlu0 %983
      %vm985 = vcmp.lt.s32.totalorder %v502, 122
      %v986 = vsel %vm985, %v982, %v984
      %v987 = vsel %vm985, %v984, %v982
      %s988 = scalar_lea.vmem %s1, 64
      %v989 = vld [vmem:[%s988] ss:$8 sm:$0x3]
      %v991 = vperm.slane %v989, 0
      %v992 = vperm.slane %v989, 1
      %v995 = vmul.f32 %v986, %v991
      %v996 = vmul.f32 %v987, %v992
      %997 = vrot.lane.b32.xlu0 %v687, 38
      %v998 = vpop.permute.xlu0 %997
      %999 = vrot.lane.b32.xlu0 %v688, 38
      %v1000 = vpop.permute.xlu0 %999
      %vm1001 = vcmp.lt.s32.totalorder %v502, 38
      %v1002 = vsel %vm1001, %v998, %v1000
      %v1003 = vsel %vm1001, %v1000, %v998
      %s1004 = scalar_lea.vmem %s1, 65
      %v1005 = vld [vmem:[%s1004] ss:$8 sm:$0x3]
      %v1007 = vperm.slane %v1005, 0
      %v1008 = vperm.slane %v1005, 1
      %v1011 = vmul.f32 %v1002, %v1007
      %v1012 = vmul.f32 %v1003, %v1008
      %s1013 = scalar_lea.vmem %s1, 66
      %v1014 = vld [vmem:[%s1013] ss:$8 sm:$0x3]
      %v1016 = vperm.slane %v1014, 0
      %v1017 = vperm.slane %v1014, 1
      %v1020 = vmul.f32 %v710, %v1016
      %v1021 = vmul.f32 %v711, %v1017
      %1022 = vrot.lane.b32.xlu0 %v687, 26
      %v1023 = vpop.permute.xlu0 %1022
      %1024 = vrot.lane.b32.xlu0 %v688, 26
      %v1025 = vpop.permute.xlu0 %1024
      %vm1026 = vcmp.lt.s32.totalorder %v502, 26
      %v1027 = vsel %vm1026, %v1023, %v1025
      %v1028 = vsel %vm1026, %v1025, %v1023
      %s1029 = scalar_lea.vmem %s1, 67
      %v1030 = vld [vmem:[%s1029] ss:$8 sm:$0x3]
      %v1032 = vperm.slane %v1030, 0
      %v1033 = vperm.slane %v1030, 1
      %v1036 = vmul.f32 %v1027, %v1032
      %v1037 = vmul.f32 %v1028, %v1033
      %v1038 = vld [vmem:[%s5] sm:$0xff]
      %v1039 = vld [vmem:[%s5 + $0x8] sm:$0xff]
      %v1040 = vld [vmem:[%s5 + $0x10] sm:$0xff]
      %v1041 = vld [vmem:[%s5 + $0x18] sm:$0xff]
      %v1042 = vld [vmem:[%s5 + $0x20] sm:$0xf]
      %v1043 = vld [vmem:[%s5 + $0x28] sm:$0xf]
      %v1044 = vld [vmem:[%s6] sm:$0xff]
      %v1045 = vld [vmem:[%s6 + $0x8] sm:$0xff]
      %v1046 = vld [vmem:[%s6 + $0x10] sm:$0xf]
      %1048 = vset.pattern.permute.xlu0 0
      %1049 = vperm.xlu0 %1048, %v1044
      %v1050 = vpop.permute.xlu0 %1049
      %1053 = vset.pattern.permute.xlu0 0
      %1054 = vperm.xlu0 %1053, %v1045
      %v1055 = vpop.permute.xlu0 %1054
      %1058 = vset.pattern.permute.xlu0 0
      %1059 = vperm.xlu0 %1058, %v1046
      %v1060 = vpop.permute.xlu0 %1059
      %vm1062 = vcmask 785408
      %v1064 = vsel %vm1062, %v1039, 0
      %v1067 = vsel %vm1062, %v1041, 0
      %v1070 = vsel %vm1062, %v1043, 0
      %1072 = vmatpush.msra.mxu0 %v895
      %1073 = vmatpush.msra.mxu0 %v687
      %1074 = vmatpush.msra.mxu0 %v879
      %1075 = vmatpush.msra.mxu0 %v863
      %1076 = vmatpush.msra.mxu0 %v847
      %1077 = vmatpush.msra.mxu0 %v831
      %1078 = vmatpush.msra.mxu0 %v815
      %1079 = vmatpush.msra.mxu0 %v799
      %1080 = vmatpush.msra.mxu0 %v783
      %1081 = vmatpush.msra.mxu0 %v767
      %1082 = vmatpush.msra.mxu0 %v687
      %1083 = vmatpush.msra.mxu0 %v751
      %1084 = vmatpush.msra.mxu0 %v735
      %1085 = vmatpush.msra.mxu0 %v719
      %1086 = vmatpush.msra.mxu0 %v703
      %1087 = vmatpush.msra.mxu0 %v687
      %1088 = vmatmul.f32.gmra.mxu0 %v1038
      %v1089 = vpop.f32.mrf.mxu0
      %v1090 = vadd.f32 %v1050, %v1089
      %1091 = vmatmul.f32.gmra.mxu0 %v1040
      %v1092 = vpop.f32.mrf.mxu0
      %v1093 = vadd.f32 %v1055, %v1092
      %1094 = vmatmul.f32.gmra.mxu0 %v1042
      %v1095 = vpop.f32.mrf.mxu0
      %v1096 = vadd.f32 %v1060, %v1095
      %1097 = vdwg.mxu0
      %1098 = vmatpush.msra.mxu0 0.0
      %1099 = vmatpush.msra.mxu0 0.0
      %1100 = vmatpush.msra.mxu0 0.0
      %1101 = vmatpush.msra.mxu0 0.0
      %1102 = vmatpush.msra.mxu0 %v1036
      %1103 = vmatpush.msra.mxu0 %v1020
      %1104 = vmatpush.msra.mxu0 %v1011
      %1105 = vmatpush.msra.mxu0 %v995
      %1106 = vmatpush.msra.mxu0 %v687
      %1107 = vmatpush.msra.mxu0 %v979
      %1108 = vmatpush.msra.mxu0 %v963
      %1109 = vmatpush.msra.mxu0 %v947
      %1110 = vmatpush.msra.mxu0 %v938
      %1111 = vmatpush.msra.mxu0 %v922
      %1112 = vmatpush.msra.mxu0 %v913
      %1113 = vmatpush.msra.mxu0 %v904
      %1114 = vmatmul.f32.gmra.mxu0 %v1064
      %v1115 = vpop.f32.mrf.mxu0
      %v1116 = vadd.f32 %v1090, %v1115
      %1117 = vmatmul.f32.gmra.mxu0 %v1067
      %v1118 = vpop.f32.mrf.mxu0
      %v1119 = vadd.f32 %v1093, %v1118
      %1120 = vmatmul.f32.gmra.mxu0 %v1070
      %v1121 = vpop.f32.mrf.mxu0
      %v1122 = vadd.f32 %v1096, %v1121
      %1123 = vdwg.mxu0
      %1124 = vmatpush.msra.mxu0 %v896
      %1125 = vmatpush.msra.mxu0 %v688
      %1126 = vmatpush.msra.mxu0 %v880
      %1127 = vmatpush.msra.mxu0 %v864
      %1128 = vmatpush.msra.mxu0 %v848
      %1129 = vmatpush.msra.mxu0 %v832
      %1130 = vmatpush.msra.mxu0 %v816
      %1131 = vmatpush.msra.mxu0 %v800
      %1132 = vmatpush.msra.mxu0 %v784
      %1133 = vmatpush.msra.mxu0 %v768
      %1134 = vmatpush.msra.mxu0 %v688
      %1135 = vmatpush.msra.mxu0 %v752
      %1136 = vmatpush.msra.mxu0 %v736
      %1137 = vmatpush.msra.mxu0 %v720
      %1138 = vmatpush.msra.mxu0 %v704
      %1139 = vmatpush.msra.mxu0 %v688
      %1140 = vmatmul.f32.gmra.mxu0 %v1038
      %v1141 = vpop.f32.mrf.mxu0
      %v1142 = vadd.f32 %v1050, %v1141
      %1143 = vmatmul.f32.gmra.mxu0 %v1040
      %v1144 = vpop.f32.mrf.mxu0
      %v1145 = vadd.f32 %v1055, %v1144
      %1146 = vmatmul.f32.gmra.mxu0 %v1042
      %v1147 = vpop.f32.mrf.mxu0
      %v1148 = vadd.f32 %v1060, %v1147
      %1149 = vdwg.mxu0
      %1150 = vmatpush.msra.mxu0 0.0
      %1151 = vmatpush.msra.mxu0 0.0
      %1152 = vmatpush.msra.mxu0 0.0
      %1153 = vmatpush.msra.mxu0 0.0
      %1154 = vmatpush.msra.mxu0 %v1037
      %1155 = vmatpush.msra.mxu0 %v1021
      %1156 = vmatpush.msra.mxu0 %v1012
      %1157 = vmatpush.msra.mxu0 %v996
      %1158 = vmatpush.msra.mxu0 %v688
      %1159 = vmatpush.msra.mxu0 %v980
      %1160 = vmatpush.msra.mxu0 %v964
      %1161 = vmatpush.msra.mxu0 %v948
      %1162 = vmatpush.msra.mxu0 %v939
      %1163 = vmatpush.msra.mxu0 %v923
      %1164 = vmatpush.msra.mxu0 %v914
      %1165 = vmatpush.msra.mxu0 %v905
      %1166 = vmatmul.f32.gmra.mxu0 %v1064
      %v1167 = vpop.f32.mrf.mxu0
      %v1168 = vadd.f32 %v1142, %v1167
      %1169 = vmatmul.f32.gmra.mxu0 %v1067
      %v1170 = vpop.f32.mrf.mxu0
      %v1171 = vadd.f32 %v1145, %v1170
      %1172 = vmatmul.f32.gmra.mxu0 %v1070
      %v1173 = vpop.f32.mrf.mxu0
      %v1174 = vadd.f32 %v1148, %v1173
      %1175 = vdwg.mxu0
      %v1176 = vld [vmem:[%s7] sm:$0xff]
      %v1177 = vld [vmem:[%s7 + $0x8] sm:$0xff]
      %v1178 = vld [vmem:[%s7 + $0x10] sm:$0xf]
      %vm1179 = vcmp.ge.f32.partialorder %v1116, 0.0
      %vm1180 = vcmp.ge.f32.partialorder %v1168, 0.0
      %vm1181 = vcmp.ge.f32.partialorder %v1119, 0.0
      %vm1182 = vcmp.ge.f32.partialorder %v1171, 0.0
      %vm1183 = vcmp.ge.f32.partialorder %v1122, 0.0
      %vm1184 = vcmp.ge.f32.partialorder %v1174, 0.0
      %1186 = vset.pattern.permute.xlu0 0
      %1187 = vperm.xlu0 %1186, %v1176
      %v1188 = vpop.permute.xlu0 %1187
      %1191 = vset.pattern.permute.xlu0 0
      %1192 = vperm.xlu0 %1191, %v1177
      %v1193 = vpop.permute.xlu0 %1192
      %1196 = vset.pattern.permute.xlu0 0
      %1197 = vperm.xlu0 %1196, %v1178
      %v1198 = vpop.permute.xlu0 %1197
      %v1200 = vmul.f32 %v1116, %v1188
      %v1201 = vmul.f32 %v1168, %v1188
      %v1202 = vmul.f32 %v1119, %v1193
      %v1203 = vmul.f32 %v1171, %v1193
      %v1204 = vmul.f32 %v1122, %v1198
      %v1205 = vmul.f32 %v1174, %v1198
      %v1206 = vsel %vm1179, %v1116, %v1200
      %v1207 = vsel %vm1180, %v1168, %v1201
      %v1208 = vsel %vm1181, %v1119, %v1202
      %v1209 = vsel %vm1182, %v1171, %v1203
      %v1210 = vsel %vm1183, %v1122, %v1204
      %v1211 = vsel %vm1184, %v1174, %v1205
      %v1212 = vadd.f32 %v1206, %v1207
      %1213 = vadd.xlane.f32.xlu0 %v1212
      %v1214 = vpop.xlane.xlu0 %1213
      %v1215 = vadd.f32 %v1208, %v1209
      %1216 = vadd.xlane.f32.xlu0 %v1215
      %v1217 = vpop.xlane.xlu0 %1216
      %vm1218 = vcmask 1043456
      %v1219 = vsel %vm1218, %v1210, 0.0
      %v1220 = vsel %vm1218, %v1211, 0.0
      %v1221 = vadd.f32 %v1219, %v1220
      %1222 = vadd.xlane.f32.xlu0 %v1221
      %v1223 = vpop.xlane.xlu0 %1222
      %v1224 = vmul.f32 %v1214, 0.00390625
      %v1225 = vmul.f32 %v1217, 0.00390625
      %v1226 = vmul.f32 %v1223, 0.00390625
      %v1227 = vld [vmem:[%s8] sm:$0xff]
      %v1228 = vld [vmem:[%s8 + $0x8] sm:$0xff]
      %v1229 = vld [vmem:[%s8 + $0x10] sm:$0xf]
      %v1230 = vmul.f32 %v1227, %v1224
      %v1231 = vmul.f32 %v1228, %v1225
      %v1232 = vmul.f32 %v1229, %v1226
      %vm1233 = vcmask 15360
      %v1234 = vsel %vm1233, %v1230, 0.0
      %v1235 = vsel %vm1233, %v1231, 0.0
      %v1236 = vadd.f32 %v1234, %v1235
      %vm1237 = vcmask 11264
      %v1238 = vsel %vm1237, %v1232, 0.0
      %v1239 = vadd.f32 %v1236, %v1238
      %v1240 = vrot.slane %v1239, 4
      %v1241 = vadd.f32 %v1239, %v1240
      %v1242 = vrot.slane %v1241, 2
      %v1243 = vadd.f32 %v1241, %v1242
      %v1244 = vrot.slane %v1243, 1
      %v1245 = vadd.f32 %v1243, %v1244
      %v1246 = vld [vmem:[%s9] sm:$0x1]
      %v1247 = vadd.f32 %v1245, %v1246
      %v1248 = vmax.f32 %v1247, 0.0
      %v1249 = vld [vmem:[%s10] sm:$0xff]
      %v1250 = vld [vmem:[%s10 + $0x8] sm:$0xff]
      %v1251 = vld [vmem:[%s10 + $0x10] sm:$0xf]
      %v1252 = vperm.slane %v1248, 0
      %v1253 = vmul.f32 %v1249, %v1252
      %v1254 = vmul.f32 %v1250, %v1252
      %v1255 = vmul.f32 %v1251, %v1252
      %v1256 = vsel %vm1233, %v1253, 0.0
      %1257 = vadd.xlane.f32.xlu0 %v1256
      %v1258 = vpop.xlane.xlu0 %1257
      %v1259 = vsel %vm1233, %v1254, 0.0
      %1260 = vadd.xlane.f32.xlu0 %v1259
      %v1261 = vpop.xlane.xlu0 %1260
      %v1262 = vsel %vm1237, %v1255, 0.0
      %1263 = vadd.xlane.f32.xlu0 %v1262
      %v1264 = vpop.xlane.xlu0 %1263
      %v1265 = vld [vmem:[%s11] sm:$0xff]
      %v1266 = vld [vmem:[%s11 + $0x8] sm:$0xff]
      %v1267 = vld [vmem:[%s11 + $0x10] sm:$0xf]
      %v1268 = vadd.f32 %v1258, %v1265
      %v1269 = vadd.f32 %v1261, %v1266
      %v1270 = vadd.f32 %v1264, %v1267
      %v1271 = vxor.u32 %v1268, 2147483648
      %v1272 = vxor.u32 %v1269, 2147483648
      %v1273 = vxor.u32 %v1270, 2147483648
      %v1274 = vmul.f32 %v1271, 1.442695
      %v1275 = vpow.pop %v1274
      %v1276 = vmul.f32 %v1272, 1.442695
      %v1277 = vpow.pop %v1276
      %v1278 = vmul.f32 %v1273, 1.442695
      %v1279 = vpow.pop %v1278
      %v1280 = vadd.f32 %v1275, 1.0
      %v1281 = vadd.f32 %v1277, 1.0
      %v1282 = vadd.f32 %v1279, 1.0
      %v1283 = vrcp.pop %v1280
      %v1284 = vmul.f32 %v1280, %v1283
      %v1285 = vsub.f32 1.0, %v1284
      %v1286 = vmul.f32 %v1283, %v1285
      %v1287 = vadd.f32 %v1283, %v1286
      %vm1288 = vweird.f32 %v1280
      %vm1289 = vweird.f32 %v1283
      %vm1290 = vmor %vm1288, %vm1289
      %v1291 = vsel %vm1290, %v1283, %v1287
      %v1292 = vand.u32 2147483647, %v1280
      %vm1293 = vcmp.eq.f32.partialorder %v1292, 8.507059e+37
      %v1294 = vand.u32 %v1280, 2147483648
      %v1295 = vor.u32 1.1754944e-38, %v1294
      %v1296 = vsel %vm1293, %v1295, %v1291
      %v1297 = vmul.f32 1.0, %v1296
      %v1298 = vrcp.pop %v1281
      %v1299 = vmul.f32 %v1281, %v1298
      %v1300 = vsub.f32 1.0, %v1299
      %v1301 = vmul.f32 %v1298, %v1300
      %v1302 = vadd.f32 %v1298, %v1301
      %vm1303 = vweird.f32 %v1281
      %vm1304 = vweird.f32 %v1298
      %vm1305 = vmor %vm1303, %vm1304
      %v1306 = vsel %vm1305, %v1298, %v1302
      %v1307 = vand.u32 2147483647, %v1281
      %vm1308 = vcmp.eq.f32.partialorder %v1307, 8.507059e+37
      %v1309 = vand.u32 %v1281, 2147483648
      %v1310 = vor.u32 1.1754944e-38, %v1309
      %v1311 = vsel %vm1308, %v1310, %v1306
      %v1312 = vmul.f32 1.0, %v1311
      %v1313 = vrcp.pop %v1282
      %v1314 = vmul.f32 %v1282, %v1313
      %v1315 = vsub.f32 1.0, %v1314
      %v1316 = vmul.f32 %v1313, %v1315
      %v1317 = vadd.f32 %v1313, %v1316
      %vm1318 = vweird.f32 %v1282
      %vm1319 = vweird.f32 %v1313
      %vm1320 = vmor %vm1318, %vm1319
      %v1321 = vsel %vm1320, %v1313, %v1317
      %v1322 = vand.u32 2147483647, %v1282
      %vm1323 = vcmp.eq.f32.partialorder %v1322, 8.507059e+37
      %v1324 = vand.u32 %v1282, 2147483648
      %v1325 = vor.u32 1.1754944e-38, %v1324
      %v1326 = vsel %vm1323, %v1325, %v1321
      %v1327 = vmul.f32 1.0, %v1326
      %v1328 = vadd.f32 %v1297, 1.0
      %v1329 = vadd.f32 %v1312, 1.0
      %v1330 = vadd.f32 %v1327, 1.0
      %1332 = vset.pattern.permute.xlu0 0
      %1333 = vperm.xlu0 %1332, %v1328
      %v1334 = vpop.permute.xlu0 %1333
      %1337 = vset.pattern.permute.xlu0 0
      %1338 = vperm.xlu0 %1337, %v1329
      %v1339 = vpop.permute.xlu0 %1338
      %1342 = vset.pattern.permute.xlu0 0
      %1343 = vperm.xlu0 %1342, %v1330
      %v1344 = vpop.permute.xlu0 %1343
      %v1346 = vmul.f32 %v1206, %v1334
      %v1347 = vmul.f32 %v1207, %v1334
      %v1348 = vmul.f32 %v1208, %v1339
      %v1349 = vmul.f32 %v1209, %v1339
      %v1350 = vmul.f32 %v1210, %v1344
      %v1351 = vmul.f32 %v1211, %v1344
      %v1352 = vld [vmem:[%s12] sm:$0xff]
      %v1353 = vld [vmem:[%s13] sm:$0xff]
      %1355 = vset.pattern.permute.xlu0 0
      %1356 = vperm.xlu0 %1355, %v1353
      %v1357 = vpop.permute.xlu0 %1356
      %vm1359 = vcmask 162816
      %v1361 = vsel %vm1359, %v1352, 0
      %v1364 = vsel %vm1218, %v1350, 0
      %v1367 = vsel %vm1218, %v1351, 0
      %1369 = vmatpush.msra.mxu0 0.0
      %1370 = vmatpush.msra.mxu0 0.0
      %1371 = vmatpush.msra.mxu0 0.0
      %1372 = vmatpush.msra.mxu0 0.0
      %1373 = vmatpush.msra.mxu0 0.0
      %1374 = vmatpush.msra.mxu0 0.0
      %1375 = vmatpush.msra.mxu0 0.0
      %1376 = vmatpush.msra.mxu0 0.0
      %1377 = vmatpush.msra.mxu0 0.0
      %1378 = vmatpush.msra.mxu0 0.0
      %1379 = vmatpush.msra.mxu0 0.0
      %1380 = vmatpush.msra.mxu0 0.0
      %1381 = vmatpush.msra.mxu0 0.0
      %1382 = vmatpush.msra.mxu0 %v1364
      %1383 = vmatpush.msra.mxu0 %v1348
      %1384 = vmatpush.msra.mxu0 %v1346
      %1385 = vmatmul.f32.gmra.mxu0 %v1361
      %v1386 = vpop.f32.mrf.mxu0
      %v1387 = vadd.f32 %v1357, %v1386
      %1388 = vdwg.mxu0
      %1389 = vmatpush.msra.mxu0 0.0
      %1390 = vmatpush.msra.mxu0 0.0
      %1391 = vmatpush.msra.mxu0 0.0
      %1392 = vmatpush.msra.mxu0 0.0
      %1393 = vmatpush.msra.mxu0 0.0
      %1394 = vmatpush.msra.mxu0 0.0
      %1395 = vmatpush.msra.mxu0 0.0
      %1396 = vmatpush.msra.mxu0 0.0
      %1397 = vmatpush.msra.mxu0 0.0
      %1398 = vmatpush.msra.mxu0 0.0
      %1399 = vmatpush.msra.mxu0 0.0
      %1400 = vmatpush.msra.mxu0 0.0
      %1401 = vmatpush.msra.mxu0 0.0
      %1402 = vmatpush.msra.mxu0 %v1367
      %1403 = vmatpush.msra.mxu0 %v1349
      %1404 = vmatpush.msra.mxu0 %v1347
      %1405 = vmatmul.f32.gmra.mxu0 %v1361
      %v1406 = vpop.f32.mrf.mxu0
      %v1407 = vadd.f32 %v1357, %v1406
      %1408 = vdwg.mxu0
      %v1409 = vld [vmem:[%s14] sm:$0xff]
      %vm1410 = vcmp.ge.f32.partialorder %v1387, 0.0
      %vm1411 = vcmp.ge.f32.partialorder %v1407, 0.0
      %1413 = vset.pattern.permute.xlu0 0
      %1414 = vperm.xlu0 %1413, %v1409
      %v1415 = vpop.permute.xlu0 %1414
      %v1417 = vmul.f32 %v1387, %v1415
      %v1418 = vmul.f32 %v1407, %v1415
      %v1419 = vsel %vm1410, %v1387, %v1417
      %v1420 = vsel %vm1411, %v1407, %v1418
      %1421 = vst [vmem:[%s494] sm:$0xff] %v1419
      %1422 = vst [vmem:[%s494 + $0x8] sm:$0xff] %v1420
      %p1423 = scmp.lt.s32.totalorder %s26, 1
      %s1424 = scalar_select %p1423, %s26, 1
      %s1425 = smul.addr %s1424, 2
      %s1426 = smul.addr %s1425, 8
      %s1427 = scalar_lea.vmem %s15, %s1426
      // Predicated region
      $region81: #{aspp_forward.1} parent=79 // pred_check
        %p1428 = pneg %p364
      $region82: #{aspp_forward.1} parent=79 // pred_check_branch
        %1430 = sbr.rel (%p1428) target = $region84
      $region83: #{aspp_forward.1} parent=79 // pred_region
        _
      $region84: #{aspp_forward.1} parent=79 // pred_fallthru
        _
    $region80: #{aspp_forward.1} parent=5 // pred_fallthru
      _
    %p1431 = scmp.le.s32.totalorder 2, %s21
    // Predicated region
    $region85: #{aspp_forward.1} parent=5 // pred_check
      %p1432 = pneg %p1431
    $region86: #{aspp_forward.1} parent=5 // pred_check_branch
      %1434 = sbr.rel (%p1432) target = $region88
    $region87: #{aspp_forward.1} parent=5 // pred_region
      %s1435 = ssub.s32 %s21, 2
      // Predicated region
      $region89: #{aspp_forward.1} parent=87 // pred_check
        %p1436 = pneg %p370
      $region90: #{aspp_forward.1} parent=87 // pred_check_branch
        %1438 = sbr.rel (%p1436) target = $region92
      $region91: #{aspp_forward.1} parent=87 // pred_region
        %p1439 = scmp.lt.s32.totalorder %s27, 1
        %s1440 = scalar_select %p1439, %s27, 1
        %s1441 = smul.addr %s1440, 2
        %s1442 = smul.addr %s1441, 8
        %s1443 = scalar_lea.vmem %s15, %s1442
      $region92: #{aspp_forward.1} parent=87 // pred_fallthru
        _
    $region88: #{aspp_forward.1} parent=5 // pred_fallthru
      _
  $region6: #{aspp_forward.1} parent=0 // loop_footer
    %s25 = sadd.s32 1, %s21
  $region7: #{aspp_forward.1} parent=0 // loop_footer_branch
    %20 = sbr.rel target = $region3
  $region8: #{aspp_forward.1} parent=0 // loop_exit
    _

</llo_original>
